<compile_context>
chip_gen: v6e
topology: v6e:2x2x1
jax: 0.10.0
libtpu: 0.0.40
codegen_flags: <defaults>
</compile_context>

<pallas_src>
import functools
import math

import jax
import jax.numpy as jnp
from jax import lax
from jax.experimental import pallas as pl
from jax.experimental.pallas import tpu as pltpu


def _round_up(a, b):
    return ((a + b - 1) // b) * b


# ---------------------------------------------------------------------------
# Pallas kernel 1: per-tile BN partial statistics of y = x @ W (y stays in VMEM/vregs only)
#   x_ref: (tile_n, Cin), w_ref: (Cin, Cout)
#   stats_ref: (2, Cout)  row 0 = sum_n y, row 1 = sum_n y^2   (per tile; reduced in JAX)
# ---------------------------------------------------------------------------
def _linear_stats_kernel(x_ref, w_ref, stats_ref):
    y = jnp.dot(x_ref[...], w_ref[...], preferred_element_type=jnp.float32)
    s1 = jnp.sum(y, axis=0, keepdims=True)          # (1, Cout)
    s2 = jnp.sum(y * y, axis=0, keepdims=True)      # (1, Cout)
    # Single (2, Cout) store (row-select broadcast avoids a sublane concat).
    row = lax.broadcasted_iota(jnp.int32, (2, s1.shape[1]), 0)
    stats_ref[...] = jnp.where(row == 0, s1, s2)


def pallas_linear_stats(x, w, *, tile_n=4096):
    """x: (N, Cin), w: (Cin, Cout) -> stats: (num_tiles, 2, Cout) f32 partial sums."""
    n, cin = x.shape
    cout = w.shape[1]
    tile_n = min(tile_n, _round_up(n, 8))
    n_pad = _round_up(n, tile_n)
    if n_pad != n:
        # Zero rows are safe ONLY because the Linear bias is dropped (BN cancels it):
        # zero x rows -> zero y rows -> sum/sumsq unaffected; the divisor stays n_total.
        x = jnp.pad(x, ((0, n_pad - n), (0, 0)))
    num_tiles = n_pad // tile_n

    stats = pl.pallas_call(
        _linear_stats_kernel,
        out_shape=jax.ShapeDtypeStruct((num_tiles, 2, cout), jnp.float32),
        grid_spec=pltpu.PrefetchScalarGridSpec(
            num_scalar_prefetch=0,
            grid=(num_tiles,),
            in_specs=[
                pl.BlockSpec((tile_n, cin), lambda i: (i, 0)),
                pl.BlockSpec((cin, cout), lambda i: (0, 0)),
            ],
            out_specs=pl.BlockSpec((None, 2, cout), lambda i: (i, 0, 0)),
        ),
        compiler_params=pltpu.CompilerParams(
            dimension_semantics=("parallel",),
        ),
    )(x, w)
    return stats


# ---------------------------------------------------------------------------
# Pallas kernel 2: fused Linear(BN-scale folded) + shift + ReLU + max over k neighbours
#   x_ref     : (k, tile_m, Cin)  gathered neighbour features, neighbour-major
#   w_ref     : (Cin, Cout)       W * (gamma / std)  (BN scale folded into the weight)
#   shift_ref : (1, Cout)         beta - mean * gamma / std
#   o_ref     : (tile_m, Cout)    per-cluster output (one slab store per grid step)
# The affine (+ReLU) is applied per neighbour BEFORE the max, so the result is exact even for
# negative BN gamma (max does not commute with a negative affine).
# ---------------------------------------------------------------------------
def _edge_mlp_max_kernel(x_ref, w_ref, shift_ref, o_ref, *, k):
    w = w_ref[...]
    shift = shift_ref[...]
    acc = jnp.maximum(
        jnp.dot(x_ref[0], w, preferred_element_type=jnp.float32) + shift, 0.0)
    for j in range(1, k):   # k is small & static -> fully unrolled for LLO visibility
        zj = jnp.maximum(
            jnp.dot(x_ref[j], w, preferred_element_type=jnp.float32) + shift, 0.0)
        acc = jnp.maximum(acc, zj)
    o_ref[...] = acc


def pallas_edge_mlp_max(x_nbr_kmaj, w_scaled, shift, *, k, tile_m_max=128):
    """x_nbr_kmaj: (k, M, Cin) gathered neighbour features -> (M, Cout)."""
    _, m_total, cin = x_nbr_kmaj.shape
    cout = w_scaled.shape[1]
    tile_m = min(tile_m_max, _round_up(m_total, 8))
    m_pad = _round_up(m_total, tile_m)
    if m_pad != m_total:
        # Zero-padded clusters produce garbage rows that are sliced away below.
        x_nbr_kmaj = jnp.pad(x_nbr_kmaj, ((0, 0), (0, m_pad - m_total), (0, 0)))
    num_t = m_pad // tile_m

    kernel = functools.partial(_edge_mlp_max_kernel, k=k)
    out = pl.pallas_call(
        kernel,
        out_shape=jax.ShapeDtypeStruct((m_pad, cout), jnp.float32),
        grid_spec=pltpu.PrefetchScalarGridSpec(
            num_scalar_prefetch=0,
            grid=(num_t,),
            in_specs=[
                pl.BlockSpec((k, tile_m, cin), lambda t: (0, t, 0)),
                pl.BlockSpec((cin, cout), lambda t: (0, 0)),
                pl.BlockSpec((1, cout), lambda t: (0, 0)),
            ],
            out_specs=pl.BlockSpec((tile_m, cout), lambda t: (t, 0)),
        ),
        compiler_params=pltpu.CompilerParams(
            dimension_semantics=("parallel",),
        ),
    )(x_nbr_kmaj, w_scaled, shift)
    return out[:m_total]
    # NOTE: Cout=32 < 128 lanes means the output store is masked; padding out_channels to 128
    # at the model level would make it lane-dense (left as a model-level choice).


# ---------------------------------------------------------------------------
# Glue: farthest point sampling + knn (data-dependent index construction).
# Assumes B equal-sized graphs of n points each (batch = repeat(arange(B), n)).
# ---------------------------------------------------------------------------
def fps_equal_graphs(pos_b, num_samples):
    """pos_b: (B, n, 3) -> per-graph indices (B, num_samples). Deterministic start at 0."""
    b, n, _ = pos_b.shape

    def body(i, carry):
        sel, min_dist, cur = carry
        sel = sel.at[:, i].set(cur)
        cur_pos = jnp.take_along_axis(pos_b, cur[:, None, None], axis=1)   # (B,1,3)
        d = jnp.sum((pos_b - cur_pos) ** 2, axis=-1)                        # (B,n)
        min_dist = jnp.minimum(min_dist, d)
        cur = jnp.argmax(min_dist, axis=1).astype(jnp.int32)
        return sel, min_dist, cur

    sel0 = jnp.zeros((b, num_samples), dtype=jnp.int32)
    md0 = jnp.full((b, n), jnp.inf, dtype=jnp.float32)
    cur0 = jnp.zeros((b,), dtype=jnp.int32)
    sel, _, _ = lax.fori_loop(0, num_samples, body, (sel0, md0, cur0))
    return sel  # (B, num_samples)


def knn_equal_graphs(pos_b, query_idx, k):
    """pos_b: (B, n, 3); query_idx: (B, m) per-graph -> per-graph nbr idx (B, m, k)."""
    q_pos = jnp.take_along_axis(pos_b, query_idx[..., None], axis=1)        # (B,m,3)
    d = jnp.sum((q_pos[:, :, None, :] - pos_b[:, None, :, :]) ** 2, -1)     # (B,m,n)
    _, idx = lax.top_k(-d, k)                                               # (B,m,k)
    return idx.astype(jnp.int32)


# ---------------------------------------------------------------------------
# TransitionDown1 forward
# ---------------------------------------------------------------------------
def transition_down1(x, pos, batch, params, *, k=16, ratio=0.01, num_graphs=2):
    n_total, _ = x.shape
    cout = params["w"].shape[1]
    n = n_total // num_graphs
    m = max(1, math.ceil(n * ratio))            # samples per graph
    pos_b = pos.reshape(num_graphs, n, 3)

    # 1) fps
    sel = fps_equal_graphs(pos_b, m)                                        # (B, m) local
    graph_off = (jnp.arange(num_graphs, dtype=jnp.int32) * n)[:, None]
    id_clusters = (sel + graph_off).reshape(-1)                             # (B*m,) global
    sub_batch = batch[id_clusters]
    sub_pos = pos[id_clusters]

    # 2) knn (within graph)
    nbr_local = knn_equal_graphs(pos_b, sel, k)                             # (B, m, k)
    nbr_global = (nbr_local + graph_off[:, :, None]).reshape(-1, k)        # (B*m, k)

    # 3) BN training-mode statistics of y = x @ W via Pallas; y is never written to HBM.
    #    The Linear bias is dropped: BN's batch-mean subtraction cancels it exactly.
    stats = pallas_linear_stats(x, params["w"])                             # (T, 2, C)
    tot = jnp.sum(stats, axis=0)                                            # (2, C)
    mean = tot[0] / n_total
    var = jnp.maximum(tot[1] / n_total - mean * mean, 0.0)                  # biased var, clamped
    inv_std = 1.0 / jnp.sqrt(var + 1e-5)
    scale = params["gamma"] * inv_std                                       # (C,)
    shift = (params["beta"] - mean * scale).reshape(1, cout)                # (1, C)
    w_scaled = params["w"] * scale[None, :]                                 # fold BN scale into W

    # 4) gather the (tiny) neighbour x rows in neighbour-major layout and run the fused
    #    Linear(+folded BN) + ReLU + max-over-k Pallas kernel (== scatter_max over knn edges).
    x_nbr_kmaj = x[nbr_global.T]                                            # (k, B*m, Cin)
    out = pallas_edge_mlp_max(x_nbr_kmaj, w_scaled, shift, k=k)             # (B*m, C)

    return out, sub_pos, sub_batch


# ---------------------------------------------------------------------------
# Pure-JAX reference (follows the PyTorch module exactly, including the bias)
# ---------------------------------------------------------------------------
def reference(x, pos, batch, params, *, k=16, ratio=0.01, num_graphs=2):
    n_total, _ = x.shape
    n = n_total // num_graphs
    m = max(1, math.ceil(n * ratio))
    pos_b = pos.reshape(num_graphs, n, 3)
    sel = fps_equal_graphs(pos_b, m)
    graph_off = (jnp.arange(num_graphs, dtype=jnp.int32) * n)[:, None]
    id_clusters = (sel + graph_off).reshape(-1)
    nbr = knn_equal_graphs(pos_b, sel, k)
    nbr_global = (nbr + graph_off[:, :, None]).reshape(-1, k)
    y = x @ params["w"] + params["b"]
    mean = jnp.mean(y, axis=0)
    var = jnp.mean((y - mean) ** 2, axis=0)
    y = (y - mean) / jnp.sqrt(var + 1e-5) * params["gamma"] + params["beta"]
    y = jnp.maximum(y, 0.0)
    out = jnp.max(y[nbr_global], axis=1)
    return out, pos[id_clusters], batch[id_clusters]


if __name__ == "__main__":
    # Small shapes consistent with the module: B=2 graphs x 128 points,
    # in_channels=8, out_channels=32, k=16, ratio=0.01.
    B, n_per_graph = 2, 128
    N = B * n_per_graph
    IN_C, OUT_C, K = 8, 32, 16

    key = jax.random.PRNGKey(0)
    kx, kp, kw, kb = jax.random.split(key, 4)
    x = jax.random.normal(kx, (N, IN_C), dtype=jnp.float32)
    pos = jax.random.uniform(kp, (N, 3), dtype=jnp.float32)
    batch = jnp.repeat(jnp.arange(B, dtype=jnp.int32), n_per_graph)

    # Deterministic synthetic parameters (Linear + BatchNorm1d default affine init).
    w = jax.random.normal(kw, (IN_C, OUT_C), dtype=jnp.float32) * (1.0 / math.sqrt(IN_C))
    b = jax.random.normal(kb, (1, OUT_C), dtype=jnp.float32) * 0.05
    params = {
        "w": w,
        "b": b,   # used only by the reference; mathematically cancelled by BN in the Pallas path
        "gamma": jnp.ones((OUT_C,), dtype=jnp.float32),
        "beta": jnp.zeros((OUT_C,), dtype=jnp.float32),
    }

    fwd = jax.jit(functools.partial(transition_down1, k=K, ratio=0.01, num_graphs=B))
    out, sub_pos, sub_batch = fwd(x, pos, batch, params)
    jax.block_until_ready((out, sub_pos, sub_batch))

    ref_out, ref_pos, ref_batch = reference(x, pos, batch, params, k=K, ratio=0.01, num_graphs=B)
    assert out.shape == ref_out.shape
    assert jnp.allclose(out, ref_out, atol=1e-3, rtol=1e-3), float(jnp.max(jnp.abs(out - ref_out)))
    assert jnp.allclose(sub_pos, ref_pos)
    assert jnp.array_equal(sub_batch, ref_batch)

    print("KERNEL_OK")
</pallas_src>

<mosaic_0001>
module attributes {stable_mosaic.version = 11 : i64} {
  func.func @_linear_stats_kernel(%arg0: i32, %arg1: memref<256x8xf32, #tpu.memory_space<vmem>>, %arg2: memref<8x32xf32, #tpu.memory_space<vmem>>, %arg3: memref<1x2x32xf32, #tpu.memory_space<vmem>>) attributes {dimension_semantics = [#tpu.dimension_semantics<parallel>], iteration_bounds = array<i64: 1>, scalar_prefetch = 0 : i64, scratch_operands = 0 : i64, tpu.core_type = #tpu.core_type<tc>, window_params = [{transform_indices = @transform_0, window_bounds = array<i64: 256, 8>}, {pipeline_mode = #tpu.pipeline_mode<synchronous>, transform_indices = @transform_1, window_bounds = array<i64: 8, 32>}, {transform_indices = @transform_2, window_bounds = array<i64: 1, 2, 32>}]} {
    %c0 = arith.constant 0 : index
    %c0_0 = arith.constant 0 : index
    %0 = vector.load %arg1[%c0, %c0_0] : memref<256x8xf32, #tpu.memory_space<vmem>>, vector<256x8xf32>
    %c0_1 = arith.constant 0 : index
    %c0_2 = arith.constant 0 : index
    %1 = vector.load %arg2[%c0_1, %c0_2] : memref<8x32xf32, #tpu.memory_space<vmem>>, vector<8x32xf32>
    %cst = arith.constant dense<0.000000e+00> : vector<256x32xf32>
    %2 = tpu.matmul %0, %1, %cst {dimension_numbers = #tpu.dot_dimension_numbers<[1], [0], [0], [1], [0, 0, 1, 1], [], []>} : vector<256x8xf32>, vector<8x32xf32>, vector<256x32xf32> -> vector<256x32xf32>
    %cst_3 = arith.constant dense<0.000000e+00> : vector<32xf32>
    %3 = vector.multi_reduction <add>, %2, %cst_3 [0] : vector<256x32xf32> to vector<32xf32>
    %4 = vector.shape_cast %3 : vector<32xf32> to vector<1x32xf32>
    %5 = arith.mulf %2, %2 : vector<256x32xf32>
    %cst_4 = arith.constant dense<0.000000e+00> : vector<32xf32>
    %6 = vector.multi_reduction <add>, %5, %cst_4 [0] : vector<256x32xf32> to vector<32xf32>
    %7 = vector.shape_cast %6 : vector<32xf32> to vector<1x32xf32>
    %8 = tpu.iota {dimensions = array<i32: 0>} : vector<2x32xi32>
    %c0_i32 = arith.constant 0 : i32
    %9 = vector.broadcast %c0_i32 : i32 to vector<2x32xi32>
    %10 = arith.cmpi eq, %8, %9 : vector<2x32xi32>
    %11 = vector.shape_cast %4 : vector<1x32xf32> to vector<1x32xf32>
    %12 = vector.broadcast %11 : vector<1x32xf32> to vector<2x32xf32>
    %13 = vector.shape_cast %7 : vector<1x32xf32> to vector<1x32xf32>
    %14 = vector.broadcast %13 : vector<1x32xf32> to vector<2x32xf32>
    %15 = arith.select %10, %12, %14 : vector<2x32xi1>, vector<2x32xf32>
    %c0_5 = arith.constant 0 : index
    %c0_6 = arith.constant 0 : index
    %c0_7 = arith.constant 0 : index
    %16 = vector.load %arg3[%c0_5, %c0_6, %c0_7] : memref<1x2x32xf32, #tpu.memory_space<vmem>>, vector<1x2x32xf32>
    %17 = vector.shape_cast %16 : vector<1x2x32xf32> to vector<2x32xf32>
    %18 = vector.shape_cast %15 : vector<2x32xf32> to vector<1x2x32xf32>
    tpu.vector_store %arg3[%c0_5, %c0_6, %c0_7], %18 {strides = array<i32>} : memref<1x2x32xf32, #tpu.memory_space<vmem>>, vector<1x2x32xf32>,
    return
  }
  func.func @transform_0(%arg0: i32) -> (i32, i32) {
    %c0_i32 = arith.constant 0 : i32
    %c0_i32_0 = arith.constant 0 : i32
    return %arg0, %c0_i32 : i32, i32
  }
  func.func @transform_1(%arg0: i32) -> (i32, i32) {
    %c0_i32 = arith.constant 0 : i32
    %c0_i32_0 = arith.constant 0 : i32
    %c0_i32_1 = arith.constant 0 : i32
    return %c0_i32, %c0_i32_0 : i32, i32
  }
  func.func @transform_2(%arg0: i32) -> (i32, i32, i32) {
    %c0_i32 = arith.constant 0 : i32
    %c0_i32_0 = arith.constant 0 : i32
    %c0_i32_1 = arith.constant 0 : i32
    return %arg0, %c0_i32, %c0_i32_0 : i32, i32, i32
  }
}

module attributes {stable_mosaic.version = 11 : i64} {
  func.func @_edge_mlp_max_kernel(%arg0: i32, %arg1: memref<16x8x8xf32, #tpu.memory_space<vmem>>, %arg2: memref<8x32xf32, #tpu.memory_space<vmem>>, %arg3: memref<1x32xf32, #tpu.memory_space<vmem>>, %arg4: memref<8x32xf32, #tpu.memory_space<vmem>>) attributes {dimension_semantics = [#tpu.dimension_semantics<parallel>], iteration_bounds = array<i64: 1>, scalar_prefetch = 0 : i64, scratch_operands = 0 : i64, tpu.core_type = #tpu.core_type<tc>, window_params = [{transform_indices = @transform_0, window_bounds = array<i64: 16, 8, 8>}, {pipeline_mode = #tpu.pipeline_mode<synchronous>, transform_indices = @transform_1, window_bounds = array<i64: 8, 32>}, {pipeline_mode = #tpu.pipeline_mode<synchronous>, transform_indices = @transform_2, window_bounds = array<i64: 1, 32>}, {transform_indices = @transform_3, window_bounds = array<i64: 8, 32>}]} {
    %c0 = arith.constant 0 : index
    %c0_0 = arith.constant 0 : index
    %0 = vector.load %arg2[%c0, %c0_0] : memref<8x32xf32, #tpu.memory_space<vmem>>, vector<8x32xf32>
    %c0_1 = arith.constant 0 : index
    %c0_2 = arith.constant 0 : index
    %1 = vector.load %arg3[%c0_1, %c0_2] : memref<1x32xf32, #tpu.memory_space<vmem>>, vector<1x32xf32>
    %c0_3 = arith.constant 0 : index
    %c0_4 = arith.constant 0 : index
    %c0_5 = arith.constant 0 : index
    %2 = vector.load %arg1[%c0_3, %c0_4, %c0_5] : memref<16x8x8xf32, #tpu.memory_space<vmem>>, vector<1x8x8xf32>
    %3 = vector.shape_cast %2 : vector<1x8x8xf32> to vector<8x8xf32>
    %cst = arith.constant dense<0.000000e+00> : vector<8x32xf32>
    %4 = tpu.matmul %3, %0, %cst {dimension_numbers = #tpu.dot_dimension_numbers<[1], [0], [0], [1], [0, 0, 1, 1], [], []>} : vector<8x8xf32>, vector<8x32xf32>, vector<8x32xf32> -> vector<8x32xf32>
    %5 = vector.broadcast %1 : vector<1x32xf32> to vector<8x32xf32>
    %6 = arith.addf %4, %5 : vector<8x32xf32>
    %cst_6 = arith.constant 0.000000e+00 : f32
    %7 = vector.broadcast %cst_6 : f32 to vector<8x32xf32>
    %8 = arith.maximumf %6, %7 : vector<8x32xf32>
    %c1 = arith.constant 1 : index
    %c0_7 = arith.constant 0 : index
    %c0_8 = arith.constant 0 : index
    %9 = vector.load %arg1[%c1, %c0_7, %c0_8] : memref<16x8x8xf32, #tpu.memory_space<vmem>>, vector<1x8x8xf32>
    %10 = vector.shape_cast %9 : vector<1x8x8xf32> to vector<8x8xf32>
    %cst_9 = arith.constant dense<0.000000e+00> : vector<8x32xf32>
    %11 = tpu.matmul %10, %0, %cst_9 {dimension_numbers = #tpu.dot_dimension_numbers<[1], [0], [0], [1], [0, 0, 1, 1], [], []>} : vector<8x8xf32>, vector<8x32xf32>, vector<8x32xf32> -> vector<8x32xf32>
    %12 = vector.broadcast %1 : vector<1x32xf32> to vector<8x32xf32>
    %13 = arith.addf %11, %12 : vector<8x32xf32>
    %cst_10 = arith.constant 0.000000e+00 : f32
    %14 = vector.broadcast %cst_10 : f32 to vector<8x32xf32>
    %15 = arith.maximumf %13, %14 : vector<8x32xf32>
    %16 = arith.maximumf %8, %15 : vector<8x32xf32>
    %c2 = arith.constant 2 : index
    %c0_11 = arith.constant 0 : index
    %c0_12 = arith.constant 0 : index
    %17 = vector.load %arg1[%c2, %c0_11, %c0_12] : memref<16x8x8xf32, #tpu.memory_space<vmem>>, vector<1x8x8xf32>
    %18 = vector.shape_cast %17 : vector<1x8x8xf32> to vector<8x8xf32>
    %cst_13 = arith.constant dense<0.000000e+00> : vector<8x32xf32>
    %19 = tpu.matmul %18, %0, %cst_13 {dimension_numbers = #tpu.dot_dimension_numbers<[1], [0], [0], [1], [0, 0, 1, 1], [], []>} : vector<8x8xf32>, vector<8x32xf32>, vector<8x32xf32> -> vector<8x32xf32>
    %20 = vector.broadcast %1 : vector<1x32xf32> to vector<8x32xf32>
    %21 = arith.addf %19, %20 : vector<8x32xf32>
    %cst_14 = arith.constant 0.000000e+00 : f32
    %22 = vector.broadcast %cst_14 : f32 to vector<8x32xf32>
    %23 = arith.maximumf %21, %22 : vector<8x32xf32>
    %24 = arith.maximumf %16, %23 : vector<8x32xf32>
    %c3 = arith.constant 3 : index
    %c0_15 = arith.constant 0 : index
    %c0_16 = arith.constant 0 : index
    %25 = vector.load %arg1[%c3, %c0_15, %c0_16] : memref<16x8x8xf32, #tpu.memory_space<vmem>>, vector<1x8x8xf32>
    %26 = vector.shape_cast %25 : vector<1x8x8xf32> to vector<8x8xf32>
    %cst_17 = arith.constant dense<0.000000e+00> : vector<8x32xf32>
    %27 = tpu.matmul %26, %0, %cst_17 {dimension_numbers = #tpu.dot_dimension_numbers<[1], [0], [0], [1], [0, 0, 1, 1], [], []>} : vector<8x8xf32>, vector<8x32xf32>, vector<8x32xf32> -> vector<8x32xf32>
    %28 = vector.broadcast %1 : vector<1x32xf32> to vector<8x32xf32>
    %29 = arith.addf %27, %28 : vector<8x32xf32>
    %cst_18 = arith.constant 0.000000e+00 : f32
    %30 = vector.broadcast %cst_18 : f32 to vector<8x32xf32>
    %31 = arith.maximumf %29, %30 : vector<8x32xf32>
    %32 = arith.maximumf %24, %31 : vector<8x32xf32>
    %c4 = arith.constant 4 : index
    %c0_19 = arith.constant 0 : index
    %c0_20 = arith.constant 0 : index
    %33 = vector.load %arg1[%c4, %c0_19, %c0_20] : memref<16x8x8xf32, #tpu.memory_space<vmem>>, vector<1x8x8xf32>
    %34 = vector.shape_cast %33 : vector<1x8x8xf32> to vector<8x8xf32>
    %cst_21 = arith.constant dense<0.000000e+00> : vector<8x32xf32>
    %35 = tpu.matmul %34, %0, %cst_21 {dimension_numbers = #tpu.dot_dimension_numbers<[1], [0], [0], [1], [0, 0, 1, 1], [], []>} : vector<8x8xf32>, vector<8x32xf32>, vector<8x32xf32> -> vector<8x32xf32>
    %36 = vector.broadcast %1 : vector<1x32xf32> to vector<8x32xf32>
    %37 = arith.addf %35, %36 : vector<8x32xf32>
    %cst_22 = arith.constant 0.000000e+00 : f32
    %38 = vector.broadcast %cst_22 : f32 to vector<8x32xf32>
    %39 = arith.maximumf %37, %38 : vector<8x32xf32>
    %40 = arith.maximumf %32, %39 : vector<8x32xf32>
    %c5 = arith.constant 5 : index
    %c0_23 = arith.constant 0 : index
    %c0_24 = arith.constant 0 : index
    %41 = vector.load %arg1[%c5, %c0_23, %c0_24] : memref<16x8x8xf32, #tpu.memory_space<vmem>>, vector<1x8x8xf32>
    %42 = vector.shape_cast %41 : vector<1x8x8xf32> to vector<8x8xf32>
    %cst_25 = arith.constant dense<0.000000e+00> : vector<8x32xf32>
    %43 = tpu.matmul %42, %0, %cst_25 {dimension_numbers = #tpu.dot_dimension_numbers<[1], [0], [0], [1], [0, 0, 1, 1], [], []>} : vector<8x8xf32>, vector<8x32xf32>, vector<8x32xf32> -> vector<8x32xf32>
    %44 = vector.broadcast %1 : vector<1x32xf32> to vector<8x32xf32>
    %45 = arith.addf %43, %44 : vector<8x32xf32>
    %cst_26 = arith.constant 0.000000e+00 : f32
    %46 = vector.broadcast %cst_26 : f32 to vector<8x32xf32>
    %47 = arith.maximumf %45, %46 : vector<8x32xf32>
    %48 = arith.maximumf %40, %47 : vector<8x32xf32>
    %c6 = arith.constant 6 : index
    %c0_27 = arith.constant 0 : index
    %c0_28 = arith.constant 0 : index
    %49 = vector.load %arg1[%c6, %c0_27, %c0_28] : memref<16x8x8xf32, #tpu.memory_space<vmem>>, vector<1x8x8xf32>
    %50 = vector.shape_cast %49 : vector<1x8x8xf32> to vector<8x8xf32>
    %cst_29 = arith.constant dense<0.000000e+00> : vector<8x32xf32>
    %51 = tpu.matmul %50, %0, %cst_29 {dimension_numbers = #tpu.dot_dimension_numbers<[1], [0], [0], [1], [0, 0, 1, 1], [], []>} : vector<8x8xf32>, vector<8x32xf32>, vector<8x32xf32> -> vector<8x32xf32>
    %52 = vector.broadcast %1 : vector<1x32xf32> to vector<8x32xf32>
    %53 = arith.addf %51, %52 : vector<8x32xf32>
    %cst_30 = arith.constant 0.000000e+00 : f32
    %54 = vector.broadcast %cst_30 : f32 to vector<8x32xf32>
    %55 = arith.maximumf %53, %54 : vector<8x32xf32>
    %56 = arith.maximumf %48, %55 : vector<8x32xf32>
    %c7 = arith.constant 7 : index
    %c0_31 = arith.constant 0 : index
    %c0_32 = arith.constant 0 : index
    %57 = vector.load %arg1[%c7, %c0_31, %c0_32] : memref<16x8x8xf32, #tpu.memory_space<vmem>>, vector<1x8x8xf32>
    %58 = vector.shape_cast %57 : vector<1x8x8xf32> to vector<8x8xf32>
    %cst_33 = arith.constant dense<0.000000e+00> : vector<8x32xf32>
    %59 = tpu.matmul %58, %0, %cst_33 {dimension_numbers = #tpu.dot_dimension_numbers<[1], [0], [0], [1], [0, 0, 1, 1], [], []>} : vector<8x8xf32>, vector<8x32xf32>, vector<8x32xf32> -> vector<8x32xf32>
    %60 = vector.broadcast %1 : vector<1x32xf32> to vector<8x32xf32>
    %61 = arith.addf %59, %60 : vector<8x32xf32>
    %cst_34 = arith.constant 0.000000e+00 : f32
    %62 = vector.broadcast %cst_34 : f32 to vector<8x32xf32>
    %63 = arith.maximumf %61, %62 : vector<8x32xf32>
    %64 = arith.maximumf %56, %63 : vector<8x32xf32>
    %c8 = arith.constant 8 : index
    %c0_35 = arith.constant 0 : index
    %c0_36 = arith.constant 0 : index
    %65 = vector.load %arg1[%c8, %c0_35, %c0_36] : memref<16x8x8xf32, #tpu.memory_space<vmem>>, vector<1x8x8xf32>
    %66 = vector.shape_cast %65 : vector<1x8x8xf32> to vector<8x8xf32>
    %cst_37 = arith.constant dense<0.000000e+00> : vector<8x32xf32>
    %67 = tpu.matmul %66, %0, %cst_37 {dimension_numbers = #tpu.dot_dimension_numbers<[1], [0], [0], [1], [0, 0, 1, 1], [], []>} : vector<8x8xf32>, vector<8x32xf32>, vector<8x32xf32> -> vector<8x32xf32>
    %68 = vector.broadcast %1 : vector<1x32xf32> to vector<8x32xf32>
    %69 = arith.addf %67, %68 : vector<8x32xf32>
    %cst_38 = arith.constant 0.000000e+00 : f32
    %70 = vector.broadcast %cst_38 : f32 to vector<8x32xf32>
    %71 = arith.maximumf %69, %70 : vector<8x32xf32>
    %72 = arith.maximumf %64, %71 : vector<8x32xf32>
    %c9 = arith.constant 9 : index
    %c0_39 = arith.constant 0 : index
    %c0_40 = arith.constant 0 : index
    %73 = vector.load %arg1[%c9, %c0_39, %c0_40] : memref<16x8x8xf32, #tpu.memory_space<vmem>>, vector<1x8x8xf32>
    %74 = vector.shape_cast %73 : vector<1x8x8xf32> to vector<8x8xf32>
    %cst_41 = arith.constant dense<0.000000e+00> : vector<8x32xf32>
    %75 = tpu.matmul %74, %0, %cst_41 {dimension_numbers = #tpu.dot_dimension_numbers<[1], [0], [0], [1], [0, 0, 1, 1], [], []>} : vector<8x8xf32>, vector<8x32xf32>, vector<8x32xf32> -> vector<8x32xf32>
    %76 = vector.broadcast %1 : vector<1x32xf32> to vector<8x32xf32>
    %77 = arith.addf %75, %76 : vector<8x32xf32>
    %cst_42 = arith.constant 0.000000e+00 : f32
    %78 = vector.broadcast %cst_42 : f32 to vector<8x32xf32>
    %79 = arith.maximumf %77, %78 : vector<8x32xf32>
    %80 = arith.maximumf %72, %79 : vector<8x32xf32>
    %c10 = arith.constant 10 : index
    %c0_43 = arith.constant 0 : index
    %c0_44 = arith.constant 0 : index
    %81 = vector.load %arg1[%c10, %c0_43, %c0_44] : memref<16x8x8xf32, #tpu.memory_space<vmem>>, vector<1x8x8xf32>
    %82 = vector.shape_cast %81 : vector<1x8x8xf32> to vector<8x8xf32>
    %cst_45 = arith.constant dense<0.000000e+00> : vector<8x32xf32>
    %83 = tpu.matmul %82, %0, %cst_45 {dimension_numbers = #tpu.dot_dimension_numbers<[1], [0], [0], [1], [0, 0, 1, 1], [], []>} : vector<8x8xf32>, vector<8x32xf32>, vector<8x32xf32> -> vector<8x32xf32>
    %84 = vector.broadcast %1 : vector<1x32xf32> to vector<8x32xf32>
    %85 = arith.addf %83, %84 : vector<8x32xf32>
    %cst_46 = arith.constant 0.000000e+00 : f32
    %86 = vector.broadcast %cst_46 : f32 to vector<8x32xf32>
    %87 = arith.maximumf %85, %86 : vector<8x32xf32>
    %88 = arith.maximumf %80, %87 : vector<8x32xf32>
    %c11 = arith.constant 11 : index
    %c0_47 = arith.constant 0 : index
    %c0_48 = arith.constant 0 : index
    %89 = vector.load %arg1[%c11, %c0_47, %c0_48] : memref<16x8x8xf32, #tpu.memory_space<vmem>>, vector<1x8x8xf32>
    %90 = vector.shape_cast %89 : vector<1x8x8xf32> to vector<8x8xf32>
    %cst_49 = arith.constant dense<0.000000e+00> : vector<8x32xf32>
    %91 = tpu.matmul %90, %0, %cst_49 {dimension_numbers = #tpu.dot_dimension_numbers<[1], [0], [0], [1], [0, 0, 1, 1], [], []>} : vector<8x8xf32>, vector<8x32xf32>, vector<8x32xf32> -> vector<8x32xf32>
    %92 = vector.broadcast %1 : vector<1x32xf32> to vector<8x32xf32>
    %93 = arith.addf %91, %92 : vector<8x32xf32>
    %cst_50 = arith.constant 0.000000e+00 : f32
    %94 = vector.broadcast %cst_50 : f32 to vector<8x32xf32>
    %95 = arith.maximumf %93, %94 : vector<8x32xf32>
    %96 = arith.maximumf %88, %95 : vector<8x32xf32>
    %c12 = arith.constant 12 : index
    %c0_51 = arith.constant 0 : index
    %c0_52 = arith.constant 0 : index
    %97 = vector.load %arg1[%c12, %c0_51, %c0_52] : memref<16x8x8xf32, #tpu.memory_space<vmem>>, vector<1x8x8xf32>
    %98 = vector.shape_cast %97 : vector<1x8x8xf32> to vector<8x8xf32>
    %cst_53 = arith.constant dense<0.000000e+00> : vector<8x32xf32>
    %99 = tpu.matmul %98, %0, %cst_53 {dimension_numbers = #tpu.dot_dimension_numbers<[1], [0], [0], [1], [0, 0, 1, 1], [], []>} : vector<8x8xf32>, vector<8x32xf32>, vector<8x32xf32> -> vector<8x32xf32>
    %100 = vector.broadcast %1 : vector<1x32xf32> to vector<8x32xf32>
    %101 = arith.addf %99, %100 : vector<8x32xf32>
    %cst_54 = arith.constant 0.000000e+00 : f32
    %102 = vector.broadcast %cst_54 : f32 to vector<8x32xf32>
    %103 = arith.maximumf %101, %102 : vector<8x32xf32>
    %104 = arith.maximumf %96, %103 : vector<8x32xf32>
    %c13 = arith.constant 13 : index
    %c0_55 = arith.constant 0 : index
    %c0_56 = arith.constant 0 : index
    %105 = vector.load %arg1[%c13, %c0_55, %c0_56] : memref<16x8x8xf32, #tpu.memory_space<vmem>>, vector<1x8x8xf32>
    %106 = vector.shape_cast %105 : vector<1x8x8xf32> to vector<8x8xf32>
    %cst_57 = arith.constant dense<0.000000e+00> : vector<8x32xf32>
    %107 = tpu.matmul %106, %0, %cst_57 {dimension_numbers = #tpu.dot_dimension_numbers<[1], [0], [0], [1], [0, 0, 1, 1], [], []>} : vector<8x8xf32>, vector<8x32xf32>, vector<8x32xf32> -> vector<8x32xf32>
    %108 = vector.broadcast %1 : vector<1x32xf32> to vector<8x32xf32>
    %109 = arith.addf %107, %108 : vector<8x32xf32>
    %cst_58 = arith.constant 0.000000e+00 : f32
    %110 = vector.broadcast %cst_58 : f32 to vector<8x32xf32>
    %111 = arith.maximumf %109, %110 : vector<8x32xf32>
    %112 = arith.maximumf %104, %111 : vector<8x32xf32>
    %c14 = arith.constant 14 : index
    %c0_59 = arith.constant 0 : index
    %c0_60 = arith.constant 0 : index
    %113 = vector.load %arg1[%c14, %c0_59, %c0_60] : memref<16x8x8xf32, #tpu.memory_space<vmem>>, vector<1x8x8xf32>
    %114 = vector.shape_cast %113 : vector<1x8x8xf32> to vector<8x8xf32>
    %cst_61 = arith.constant dense<0.000000e+00> : vector<8x32xf32>
    %115 = tpu.matmul %114, %0, %cst_61 {dimension_numbers = #tpu.dot_dimension_numbers<[1], [0], [0], [1], [0, 0, 1, 1], [], []>} : vector<8x8xf32>, vector<8x32xf32>, vector<8x32xf32> -> vector<8x32xf32>
    %116 = vector.broadcast %1 : vector<1x32xf32> to vector<8x32xf32>
    %117 = arith.addf %115, %116 : vector<8x32xf32>
    %cst_62 = arith.constant 0.000000e+00 : f32
    %118 = vector.broadcast %cst_62 : f32 to vector<8x32xf32>
    %119 = arith.maximumf %117, %118 : vector<8x32xf32>
    %120 = arith.maximumf %112, %119 : vector<8x32xf32>
    %c15 = arith.constant 15 : index
    %c0_63 = arith.constant 0 : index
    %c0_64 = arith.constant 0 : index
    %121 = vector.load %arg1[%c15, %c0_63, %c0_64] : memref<16x8x8xf32, #tpu.memory_space<vmem>>, vector<1x8x8xf32>
    %122 = vector.shape_cast %121 : vector<1x8x8xf32> to vector<8x8xf32>
    %cst_65 = arith.constant dense<0.000000e+00> : vector<8x32xf32>
    %123 = tpu.matmul %122, %0, %cst_65 {dimension_numbers = #tpu.dot_dimension_numbers<[1], [0], [0], [1], [0, 0, 1, 1], [], []>} : vector<8x8xf32>, vector<8x32xf32>, vector<8x32xf32> -> vector<8x32xf32>
    %124 = vector.broadcast %1 : vector<1x32xf32> to vector<8x32xf32>
    %125 = arith.addf %123, %124 : vector<8x32xf32>
    %cst_66 = arith.constant 0.000000e+00 : f32
    %126 = vector.broadcast %cst_66 : f32 to vector<8x32xf32>
    %127 = arith.maximumf %125, %126 : vector<8x32xf32>
    %128 = arith.maximumf %120, %127 : vector<8x32xf32>
    %c0_67 = arith.constant 0 : index
    %c0_68 = arith.constant 0 : index
    %129 = vector.load %arg4[%c0_67, %c0_68] : memref<8x32xf32, #tpu.memory_space<vmem>>, vector<8x32xf32>
    tpu.vector_store %arg4[%c0_67, %c0_68], %128 {strides = array<i32>} : memref<8x32xf32, #tpu.memory_space<vmem>>, vector<8x32xf32>,
    return
  }
  func.func @transform_0(%arg0: i32) -> (i32, i32, i32) {
    %c0_i32 = arith.constant 0 : i32
    %c0_i32_0 = arith.constant 0 : i32
    %c0_i32_1 = arith.constant 0 : i32
    return %c0_i32, %arg0, %c0_i32_0 : i32, i32, i32
  }
  func.func @transform_1(%arg0: i32) -> (i32, i32) {
    %c0_i32 = arith.constant 0 : i32
    %c0_i32_0 = arith.constant 0 : i32
    %c0_i32_1 = arith.constant 0 : i32
    return %c0_i32, %c0_i32_0 : i32, i32
  }
  func.func @transform_2(%arg0: i32) -> (i32, i32) {
    %c0_i32 = arith.constant 0 : i32
    %c0_i32_0 = arith.constant 0 : i32
    %c0_i32_1 = arith.constant 0 : i32
    return %c0_i32, %c0_i32_0 : i32, i32
  }
  func.func @transform_3(%arg0: i32) -> (i32, i32) {
    %c0_i32 = arith.constant 0 : i32
    %c0_i32_0 = arith.constant 0 : i32
    return %arg0, %c0_i32 : i32, i32
  }
}

</mosaic_0001>

<llo_original>
// kernel: custom-call.4
$region0: #{custom-call.4}
  %s0 = inlined_call_operand.vmem [shape: f32[2,128], index: 0, kind: output, shape index: {}]

// kernel: neg.1
$region0: #{neg.1}
  #allocation0 [shape = 's32[1]{0}', space=sflag, size = 0x4, scoped, tag = 'scoped memory for neg.1']
  %s0 = inlined_call_operand.vmem [shape: f32[2,2,128], index: 0, kind: input, shape index: {}]
  %s1 = inlined_call_operand.vmem [shape: f32[2,2,128], index: 1, kind: output, shape index: {}]
  %v2 = vld [vmem:[%s0] sm:$0x3]
  %3 = xla_tuple %v2
  %4 = xla_tuple %3
  %v5 = vxor.u32 %v2, 2147483648
  %6 = xla_tuple %v5
  %7 = vst [vmem:[%s1] sm:$0x3] %v5
  %s8 = scalar_lea.vmem %s0, 2
  %v9 = vld [vmem:[%s8] sm:$0x3]
  %10 = xla_tuple %v9
  %11 = xla_tuple %10
  %v12 = vxor.u32 %v9, 2147483648
  %13 = xla_tuple %v12
  %s14 = scalar_lea.vmem %s1, 2
  %15 = vst [vmem:[%s14] sm:$0x3] %v12

// kernel: transition_down1.2
$region0: #{transition_down1.2}
  #allocation0 [shape = 'u32[]', space=smem, size = 0x4, offset = 0x4, fixed_abs, tag = 'smem constant byte address 0x4 - core index']
  #allocation1 [shape = 'u32[144,128]{1,0:T(1,128)}', space=vmem, size = 0x12000, scoped, tag = 'internal scratch']
  %s0 = inlined_call_operand.vmem [shape: f32[256,8], index: 0, kind: input, shape index: {}]
  %s1 = inlined_call_operand.vmem [shape: f32[8,32], index: 1, kind: input, shape index: {}]
  %s2 = inlined_call_operand.vmem [shape: f32[1,2,32], index: 2, kind: output, shape index: {}]
  %s3 = sld [smem:[#allocation0]]
  $region18: #{transition_down1.2} parent=0
    _
  %s5 = ssub.s32 1, %s3
  %s6 = scalar_select 0, %s5, %s3
  // Predicated region
  $region2: #{transition_down1.2} parent=0 // pred_check
    _
  $region3: #{transition_down1.2} parent=0 // pred_check_branch
    %8 = sbr.rel (0) target = $region5
  $region4: #{transition_down1.2} parent=0 // pred_region
    _
  $region5: #{transition_down1.2} parent=0 // pred_fallthru
    _
  // Predicated region
  $region6: #{transition_down1.2} parent=0 // pred_check
    _
  $region7: #{transition_down1.2} parent=0 // pred_check_branch
    %10 = sbr.rel (0) target = $region9
  $region8: #{transition_down1.2} parent=0 // pred_region
    _
  $region9: #{transition_down1.2} parent=0 // pred_fallthru
    _
  %v11 = vld [vmem:[%s0] sm:$0xff]
  %v12 = vld [vmem:[%s0 + $0x8] sm:$0xff]
  %v13 = vld [vmem:[%s0 + $0x10] sm:$0xff]
  %v14 = vld [vmem:[%s0 + $0x18] sm:$0xff]
  %v15 = vld [vmem:[%s0 + $0x20] sm:$0xff]
  %v16 = vld [vmem:[%s0 + $0x28] sm:$0xff]
  %v17 = vld [vmem:[%s0 + $0x30] sm:$0xff]
  %v18 = vld [vmem:[%s0 + $0x38] sm:$0xff]
  %v19 = vld [vmem:[%s0 + $0x40] sm:$0xff]
  %v20 = vld [vmem:[%s0 + $0x48] sm:$0xff]
  %v21 = vld [vmem:[%s0 + $0x50] sm:$0xff]
  %v22 = vld [vmem:[%s0 + $0x58] sm:$0xff]
  %v23 = vld [vmem:[%s0 + $0x60] sm:$0xff]
  %v24 = vld [vmem:[%s0 + $0x68] sm:$0xff]
  %v25 = vld [vmem:[%s0 + $0x70] sm:$0xff]
  %v26 = vld [vmem:[%s0 + $0x78] sm:$0xff]
  %v27 = vld [vmem:[%s0 + $0x80] sm:$0xff]
  %v28 = vld [vmem:[%s0 + $0x88] sm:$0xff]
  %v29 = vld [vmem:[%s0 + $0x90] sm:$0xff]
  %v30 = vld [vmem:[%s0 + $0x98] sm:$0xff]
  %v31 = vld [vmem:[%s0 + $0xa0] sm:$0xff]
  %v32 = vld [vmem:[%s0 + $0xa8] sm:$0xff]
  %v33 = vld [vmem:[%s0 + $0xb0] sm:$0xff]
  %v34 = vld [vmem:[%s0 + $0xb8] sm:$0xff]
  %v35 = vld [vmem:[%s0 + $0xc0] sm:$0xff]
  %v36 = vld [vmem:[%s0 + $0xc8] sm:$0xff]
  %v37 = vld [vmem:[%s0 + $0xd0] sm:$0xff]
  %v38 = vld [vmem:[%s0 + $0xd8] sm:$0xff]
  %v39 = vld [vmem:[%s0 + $0xe0] sm:$0xff]
  %v40 = vld [vmem:[%s0 + $0xe8] sm:$0xff]
  %v41 = vld [vmem:[%s0 + $0xf0] sm:$0xff]
  %v42 = vld [vmem:[%s0 + $0xf8] sm:$0xff]
  %v43 = vld [vmem:[%s1] sm:$0xff]
  %vm44 = vcmask 64512
  %v46 = vsel %vm44, %v11, 0
  %v49 = vsel %vm44, %v12, 0
  %v52 = vsel %vm44, %v13, 0
  %v55 = vsel %vm44, %v14, 0
  %v58 = vsel %vm44, %v15, 0
  %v61 = vsel %vm44, %v16, 0
  %v64 = vsel %vm44, %v17, 0
  %v67 = vsel %vm44, %v18, 0
  %v70 = vsel %vm44, %v19, 0
  %v73 = vsel %vm44, %v20, 0
  %v76 = vsel %vm44, %v21, 0
  %v79 = vsel %vm44, %v22, 0
  %v82 = vsel %vm44, %v23, 0
  %v85 = vsel %vm44, %v24, 0
  %v88 = vsel %vm44, %v25, 0
  %v91 = vsel %vm44, %v26, 0
  %v94 = vsel %vm44, %v27, 0
  %v97 = vsel %vm44, %v28, 0
  %v100 = vsel %vm44, %v29, 0
  %v103 = vsel %vm44, %v30, 0
  %v106 = vsel %vm44, %v31, 0
  %v109 = vsel %vm44, %v32, 0
  %v112 = vsel %vm44, %v33, 0
  %v115 = vsel %vm44, %v34, 0
  %v118 = vsel %vm44, %v35, 0
  %v121 = vsel %vm44, %v36, 0
  %v124 = vsel %vm44, %v37, 0
  %v127 = vsel %vm44, %v38, 0
  %v130 = vsel %vm44, %v39, 0
  %v133 = vsel %vm44, %v40, 0
  %v136 = vsel %vm44, %v41, 0
  %v139 = vsel %vm44, %v42, 0
  %141 = vmatprep.subr.mxu0 0.0
  %142 = vmatpush1.msra.mxu0 0.0
  %143 = vmatprep.subr.mxu0 0.0
  %144 = vmatpush1.msra.mxu0 0.0
  %145 = vmatprep.subr.mxu0 0.0
  %146 = vmatpush1.msra.mxu0 0.0
  %147 = vmatprep.subr.mxu0 0.0
  %148 = vmatpush1.msra.mxu0 0.0
  %149 = vmatprep.subr.mxu0 0.0
  %150 = vmatpush1.msra.mxu0 0.0
  %151 = vmatprep.subr.mxu0 0.0
  %152 = vmatpush1.msra.mxu0 0.0
  %153 = vmatprep.subr.mxu0 0.0
  %154 = vmatpush1.msra.mxu0 0.0
  %155 = vmatprep.subr.mxu0 0.0
  %156 = vmatpush1.msra.mxu0 0.0
  %157 = vmatprep.subr.mxu0 0.0
  %158 = vmatpush1.msra.mxu0 0.0
  %159 = vmatprep.subr.mxu0 0.0
  %160 = vmatpush1.msra.mxu0 0.0
  %161 = vmatprep.subr.mxu0 0.0
  %162 = vmatpush1.msra.mxu0 0.0
  %163 = vmatprep.subr.mxu0 0.0
  %164 = vmatpush1.msra.mxu0 0.0
  %165 = vmatprep.subr.mxu0 0.0
  %166 = vmatpush1.msra.mxu0 0.0
  %167 = vmatprep.subr.mxu0 0.0
  %168 = vmatpush1.msra.mxu0 0.0
  %169 = vmatprep.subr.mxu0 0.0
  %170 = vmatpush1.msra.mxu0 0.0
  %171 = vmatprep.subr.mxu0 0.0
  %172 = vmatpush1.msra.mxu0 %v43
  %173 = vmatprep.subr.mxu0 0.0
  %174 = vmatpush2.msra.mxu0 0.0
  %175 = vmatprep.subr.mxu0 0.0
  %176 = vmatpush2.msra.mxu0 0.0
  %177 = vmatprep.subr.mxu0 0.0
  %178 = vmatpush2.msra.mxu0 0.0
  %179 = vmatprep.subr.mxu0 0.0
  %180 = vmatpush2.msra.mxu0 0.0
  %181 = vmatprep.subr.mxu0 0.0
  %182 = vmatpush2.msra.mxu0 0.0
  %183 = vmatprep.subr.mxu0 0.0
  %184 = vmatpush2.msra.mxu0 0.0
  %185 = vmatprep.subr.mxu0 0.0
  %186 = vmatpush2.msra.mxu0 0.0
  %187 = vmatprep.subr.mxu0 0.0
  %188 = vmatpush2.msra.mxu0 0.0
  %189 = vmatprep.subr.mxu0 0.0
  %190 = vmatpush2.msra.mxu0 0.0
  %191 = vmatprep.subr.mxu0 0.0
  %192 = vmatpush2.msra.mxu0 0.0
  %193 = vmatprep.subr.mxu0 0.0
  %194 = vmatpush2.msra.mxu0 0.0
  %195 = vmatprep.subr.mxu0 0.0
  %196 = vmatpush2.msra.mxu0 0.0
  %197 = vmatprep.subr.mxu0 0.0
  %198 = vmatpush2.msra.mxu0 0.0
  %199 = vmatprep.subr.mxu0 0.0
  %200 = vmatpush2.msra.mxu0 0.0
  %201 = vmatprep.subr.mxu0 0.0
  %202 = vmatpush2.msra.mxu0 0.0
  %203 = vmatprep.subr.mxu0 0.0
  %204 = vmatpush2.msra.mxu0 0.0
  %205 = vmatprep.mubr.f32.mxu0 0.0
  %206 = vmatmul.mubr.f32.gmra.mxu0 %v46
  %v207 = vpop.f32.mrf.mxu0
  %v208 = vadd.f32 0.0, %v207
  %v209 = vpop.f32.mrf.mxu0
  %210 = vmatprep.mubr.f32.mxu0 0.0
  %211 = vmatmul.mubr.f32.gmra.mxu0 %v49
  %v212 = vpop.f32.mrf.mxu0
  %v213 = vadd.f32 0.0, %v212
  %v214 = vpop.f32.mrf.mxu0
  %215 = vmatprep.mubr.f32.mxu0 0.0
  %216 = vmatmul.mubr.f32.gmra.mxu0 %v52
  %v217 = vpop.f32.mrf.mxu0
  %v218 = vadd.f32 0.0, %v217
  %v219 = vpop.f32.mrf.mxu0
  %220 = vmatprep.mubr.f32.mxu0 0.0
  %221 = vmatmul.mubr.f32.gmra.mxu0 %v55
  %v222 = vpop.f32.mrf.mxu0
  %v223 = vadd.f32 0.0, %v222
  %v224 = vpop.f32.mrf.mxu0
  %225 = vmatprep.mubr.f32.mxu0 0.0
  %226 = vmatmul.mubr.f32.gmra.mxu0 %v58
  %v227 = vpop.f32.mrf.mxu0
  %v228 = vadd.f32 0.0, %v227
  %v229 = vpop.f32.mrf.mxu0
  %230 = vmatprep.mubr.f32.mxu0 0.0
  %231 = vmatmul.mubr.f32.gmra.mxu0 %v61
  %v232 = vpop.f32.mrf.mxu0
  %v233 = vadd.f32 0.0, %v232
  %v234 = vpop.f32.mrf.mxu0
  %235 = vmatprep.mubr.f32.mxu0 0.0
  %236 = vmatmul.mubr.f32.gmra.mxu0 %v64
  %v237 = vpop.f32.mrf.mxu0
  %v238 = vadd.f32 0.0, %v237
  %v239 = vpop.f32.mrf.mxu0
  %240 = vmatprep.mubr.f32.mxu0 0.0
  %241 = vmatmul.mubr.f32.gmra.mxu0 %v67
  %v242 = vpop.f32.mrf.mxu0
  %v243 = vadd.f32 0.0, %v242
  %v244 = vpop.f32.mrf.mxu0
  %245 = vmatprep.mubr.f32.mxu0 0.0
  %246 = vmatmul.mubr.f32.gmra.mxu0 %v70
  %v247 = vpop.f32.mrf.mxu0
  %v248 = vadd.f32 0.0, %v247
  %v249 = vpop.f32.mrf.mxu0
  %250 = vmatprep.mubr.f32.mxu0 0.0
  %251 = vmatmul.mubr.f32.gmra.mxu0 %v73
  %v252 = vpop.f32.mrf.mxu0
  %v253 = vadd.f32 0.0, %v252
  %v254 = vpop.f32.mrf.mxu0
  %255 = vmatprep.mubr.f32.mxu0 0.0
  %256 = vmatmul.mubr.f32.gmra.mxu0 %v76
  %v257 = vpop.f32.mrf.mxu0
  %v258 = vadd.f32 0.0, %v257
  %v259 = vpop.f32.mrf.mxu0
  %260 = vmatprep.mubr.f32.mxu0 0.0
  %261 = vmatmul.mubr.f32.gmra.mxu0 %v79
  %v262 = vpop.f32.mrf.mxu0
  %v263 = vadd.f32 0.0, %v262
  %v264 = vpop.f32.mrf.mxu0
  %265 = vmatprep.mubr.f32.mxu0 0.0
  %266 = vmatmul.mubr.f32.gmra.mxu0 %v82
  %v267 = vpop.f32.mrf.mxu0
  %v268 = vadd.f32 0.0, %v267
  %v269 = vpop.f32.mrf.mxu0
  %270 = vmatprep.mubr.f32.mxu0 0.0
  %271 = vmatmul.mubr.f32.gmra.mxu0 %v85
  %v272 = vpop.f32.mrf.mxu0
  %v273 = vadd.f32 0.0, %v272
  %v274 = vpop.f32.mrf.mxu0
  %275 = vmatprep.mubr.f32.mxu0 0.0
  %276 = vmatmul.mubr.f32.gmra.mxu0 %v88
  %v277 = vpop.f32.mrf.mxu0
  %v278 = vadd.f32 0.0, %v277
  %v279 = vpop.f32.mrf.mxu0
  %280 = vmatprep.mubr.f32.mxu0 0.0
  %281 = vmatmul.mubr.f32.gmra.mxu0 %v91
  %v282 = vpop.f32.mrf.mxu0
  %v283 = vadd.f32 0.0, %v282
  %v284 = vpop.f32.mrf.mxu0
  %285 = vmatprep.mubr.f32.mxu0 0.0
  %286 = vmatmul.mubr.f32.gmra.mxu0 %v94
  %v287 = vpop.f32.mrf.mxu0
  %v288 = vadd.f32 0.0, %v287
  %v289 = vpop.f32.mrf.mxu0
  %290 = vmatprep.mubr.f32.mxu0 0.0
  %291 = vmatmul.mubr.f32.gmra.mxu0 %v97
  %v292 = vpop.f32.mrf.mxu0
  %v293 = vadd.f32 0.0, %v292
  %v294 = vpop.f32.mrf.mxu0
  %295 = vmatprep.mubr.f32.mxu0 0.0
  %296 = vmatmul.mubr.f32.gmra.mxu0 %v100
  %v297 = vpop.f32.mrf.mxu0
  %v298 = vadd.f32 0.0, %v297
  %v299 = vpop.f32.mrf.mxu0
  %300 = vmatprep.mubr.f32.mxu0 0.0
  %301 = vmatmul.mubr.f32.gmra.mxu0 %v103
  %v302 = vpop.f32.mrf.mxu0
  %v303 = vadd.f32 0.0, %v302
  %v304 = vpop.f32.mrf.mxu0
  %305 = vmatprep.mubr.f32.mxu0 0.0
  %306 = vmatmul.mubr.f32.gmra.mxu0 %v106
  %v307 = vpop.f32.mrf.mxu0
  %v308 = vadd.f32 0.0, %v307
  %v309 = vpop.f32.mrf.mxu0
  %310 = vmatprep.mubr.f32.mxu0 0.0
  %311 = vmatmul.mubr.f32.gmra.mxu0 %v109
  %v312 = vpop.f32.mrf.mxu0
  %v313 = vadd.f32 0.0, %v312
  %v314 = vpop.f32.mrf.mxu0
  %315 = vmatprep.mubr.f32.mxu0 0.0
  %316 = vmatmul.mubr.f32.gmra.mxu0 %v112
  %v317 = vpop.f32.mrf.mxu0
  %v318 = vadd.f32 0.0, %v317
  %v319 = vpop.f32.mrf.mxu0
  %320 = vmatprep.mubr.f32.mxu0 0.0
  %321 = vmatmul.mubr.f32.gmra.mxu0 %v115
  %v322 = vpop.f32.mrf.mxu0
  %v323 = vadd.f32 0.0, %v322
  %v324 = vpop.f32.mrf.mxu0
  %325 = vmatprep.mubr.f32.mxu0 0.0
  %326 = vmatmul.mubr.f32.gmra.mxu0 %v118
  %v327 = vpop.f32.mrf.mxu0
  %v328 = vadd.f32 0.0, %v327
  %v329 = vpop.f32.mrf.mxu0
  %330 = vmatprep.mubr.f32.mxu0 0.0
  %331 = vmatmul.mubr.f32.gmra.mxu0 %v121
  %v332 = vpop.f32.mrf.mxu0
  %v333 = vadd.f32 0.0, %v332
  %v334 = vpop.f32.mrf.mxu0
  %335 = vmatprep.mubr.f32.mxu0 0.0
  %336 = vmatmul.mubr.f32.gmra.mxu0 %v124
  %v337 = vpop.f32.mrf.mxu0
  %v338 = vadd.f32 0.0, %v337
  %v339 = vpop.f32.mrf.mxu0
  %340 = vmatprep.mubr.f32.mxu0 0.0
  %341 = vmatmul.mubr.f32.gmra.mxu0 %v127
  %v342 = vpop.f32.mrf.mxu0
  %v343 = vadd.f32 0.0, %v342
  %v344 = vpop.f32.mrf.mxu0
  %345 = vmatprep.mubr.f32.mxu0 0.0
  %346 = vmatmul.mubr.f32.gmra.mxu0 %v130
  %v347 = vpop.f32.mrf.mxu0
  %v348 = vadd.f32 0.0, %v347
  %v349 = vpop.f32.mrf.mxu0
  %350 = vmatprep.mubr.f32.mxu0 0.0
  %351 = vmatmul.mubr.f32.gmra.mxu0 %v133
  %v352 = vpop.f32.mrf.mxu0
  %v353 = vadd.f32 0.0, %v352
  %v354 = vpop.f32.mrf.mxu0
  %355 = vmatprep.mubr.f32.mxu0 0.0
  %356 = vmatmul.mubr.f32.gmra.mxu0 %v136
  %v357 = vpop.f32.mrf.mxu0
  %v358 = vadd.f32 0.0, %v357
  %v359 = vpop.f32.mrf.mxu0
  %360 = vmatprep.mubr.f32.mxu0 0.0
  %361 = vmatmul.mubr.f32.gmra.mxu0 %v139
  %v362 = vpop.f32.mrf.mxu0
  %v363 = vadd.f32 0.0, %v362
  %v364 = vpop.f32.mrf.mxu0
  %365 = vdwg.mxu0
  %vm366 = vcmask 261120
  %v367 = vsel %vm366, %v208, 0.0
  %v368 = vsel %vm366, %v213, 0.0
  %v369 = vadd.f32 %v367, %v368
  %v370 = vsel %vm366, %v218, 0.0
  %v371 = vadd.f32 %v369, %v370
  %v372 = vsel %vm366, %v223, 0.0
  %v373 = vadd.f32 %v371, %v372
  %v374 = vsel %vm366, %v228, 0.0
  %v375 = vadd.f32 %v373, %v374
  %v376 = vsel %vm366, %v233, 0.0
  %v377 = vadd.f32 %v375, %v376
  %v378 = vsel %vm366, %v238, 0.0
  %v379 = vadd.f32 %v377, %v378
  %v380 = vsel %vm366, %v243, 0.0
  %v381 = vadd.f32 %v379, %v380
  %v382 = vsel %vm366, %v248, 0.0
  %v383 = vadd.f32 %v381, %v382
  %v384 = vsel %vm366, %v253, 0.0
  %v385 = vadd.f32 %v383, %v384
  %v386 = vsel %vm366, %v258, 0.0
  %v387 = vadd.f32 %v385, %v386
  %v388 = vsel %vm366, %v263, 0.0
  %v389 = vadd.f32 %v387, %v388
  %v390 = vsel %vm366, %v268, 0.0
  %v391 = vadd.f32 %v389, %v390
  %v392 = vsel %vm366, %v273, 0.0
  %v393 = vadd.f32 %v391, %v392
  %v394 = vsel %vm366, %v278, 0.0
  %v395 = vadd.f32 %v393, %v394
  %v396 = vsel %vm366, %v283, 0.0
  %v397 = vadd.f32 %v395, %v396
  %v398 = vsel %vm366, %v288, 0.0
  %v399 = vadd.f32 %v397, %v398
  %v400 = vsel %vm366, %v293, 0.0
  %v401 = vadd.f32 %v399, %v400
  %v402 = vsel %vm366, %v298, 0.0
  %v403 = vadd.f32 %v401, %v402
  %v404 = vsel %vm366, %v303, 0.0
  %v405 = vadd.f32 %v403, %v404
  %v406 = vsel %vm366, %v308, 0.0
  %v407 = vadd.f32 %v405, %v406
  %v408 = vsel %vm366, %v313, 0.0
  %v409 = vadd.f32 %v407, %v408
  %v410 = vsel %vm366, %v318, 0.0
  %v411 = vadd.f32 %v409, %v410
  %v412 = vsel %vm366, %v323, 0.0
  %v413 = vadd.f32 %v411, %v412
  %v414 = vsel %vm366, %v328, 0.0
  %v415 = vadd.f32 %v413, %v414
  %v416 = vsel %vm366, %v333, 0.0
  %v417 = vadd.f32 %v415, %v416
  %v418 = vsel %vm366, %v338, 0.0
  %v419 = vadd.f32 %v417, %v418
  %v420 = vsel %vm366, %v343, 0.0
  %v421 = vadd.f32 %v419, %v420
  %v422 = vsel %vm366, %v348, 0.0
  %v423 = vadd.f32 %v421, %v422
  %v424 = vsel %vm366, %v353, 0.0
  %v425 = vadd.f32 %v423, %v424
  %v426 = vsel %vm366, %v358, 0.0
  %v427 = vadd.f32 %v425, %v426
  %v428 = vsel %vm366, %v363, 0.0
  %v429 = vadd.f32 %v427, %v428
  %v430 = vrot.slane %v429, 4
  %v431 = vadd.f32 %v429, %v430
  %v432 = vrot.slane %v431, 2
  %v433 = vadd.f32 %v431, %v432
  %v434 = vrot.slane %v433, 1
  %v435 = vadd.f32 %v433, %v434
  %v436 = vmul.f32 %v208, %v208
  %v437 = vmul.f32 %v213, %v213
  %v438 = vmul.f32 %v218, %v218
  %v439 = vmul.f32 %v223, %v223
  %v440 = vmul.f32 %v228, %v228
  %v441 = vmul.f32 %v233, %v233
  %v442 = vmul.f32 %v238, %v238
  %v443 = vmul.f32 %v243, %v243
  %v444 = vmul.f32 %v248, %v248
  %v445 = vmul.f32 %v253, %v253
  %v446 = vmul.f32 %v258, %v258
  %v447 = vmul.f32 %v263, %v263
  %v448 = vmul.f32 %v268, %v268
  %v449 = vmul.f32 %v273, %v273
  %v450 = vmul.f32 %v278, %v278
  %v451 = vmul.f32 %v283, %v283
  %v452 = vmul.f32 %v288, %v288
  %v453 = vmul.f32 %v293, %v293
  %v454 = vmul.f32 %v298, %v298
  %v455 = vmul.f32 %v303, %v303
  %v456 = vmul.f32 %v308, %v308
  %v457 = vmul.f32 %v313, %v313
  %v458 = vmul.f32 %v318, %v318
  %v459 = vmul.f32 %v323, %v323
  %v460 = vmul.f32 %v328, %v328
  %v461 = vmul.f32 %v333, %v333
  %v462 = vmul.f32 %v338, %v338
  %v463 = vmul.f32 %v343, %v343
  %v464 = vmul.f32 %v348, %v348
  %v465 = vmul.f32 %v353, %v353
  %v466 = vmul.f32 %v358, %v358
  %v467 = vmul.f32 %v363, %v363
  %v468 = vsel %vm366, %v436, 0.0
  %v469 = vsel %vm366, %v437, 0.0
  %v470 = vadd.f32 %v468, %v469
  %v471 = vsel %vm366, %v438, 0.0
  %v472 = vadd.f32 %v470, %v471
  %v473 = vsel %vm366, %v439, 0.0
  %v474 = vadd.f32 %v472, %v473
  %v475 = vsel %vm366, %v440, 0.0
  %v476 = vadd.f32 %v474, %v475
  %v477 = vsel %vm366, %v441, 0.0
  %v478 = vadd.f32 %v476, %v477
  %v479 = vsel %vm366, %v442, 0.0
  %v480 = vadd.f32 %v478, %v479
  %v481 = vsel %vm366, %v443, 0.0
  %v482 = vadd.f32 %v480, %v481
  %v483 = vsel %vm366, %v444, 0.0
  %v484 = vadd.f32 %v482, %v483
  %v485 = vsel %vm366, %v445, 0.0
  %v486 = vadd.f32 %v484, %v485
  %v487 = vsel %vm366, %v446, 0.0
  %v488 = vadd.f32 %v486, %v487
  %v489 = vsel %vm366, %v447, 0.0
  %v490 = vadd.f32 %v488, %v489
  %v491 = vsel %vm366, %v448, 0.0
  %v492 = vadd.f32 %v490, %v491
  %v493 = vsel %vm366, %v449, 0.0
  %v494 = vadd.f32 %v492, %v493
  %v495 = vsel %vm366, %v450, 0.0
  %v496 = vadd.f32 %v494, %v495
  %v497 = vsel %vm366, %v451, 0.0
  %v498 = vadd.f32 %v496, %v497
  %v499 = vsel %vm366, %v452, 0.0
  %v500 = vadd.f32 %v498, %v499
  %v501 = vsel %vm366, %v453, 0.0
  %v502 = vadd.f32 %v500, %v501
  %v503 = vsel %vm366, %v454, 0.0
  %v504 = vadd.f32 %v502, %v503
  %v505 = vsel %vm366, %v455, 0.0
  %v506 = vadd.f32 %v504, %v505
  %v507 = vsel %vm366, %v456, 0.0
  %v508 = vadd.f32 %v506, %v507
  %v509 = vsel %vm366, %v457, 0.0
  %v510 = vadd.f32 %v508, %v509
  %v511 = vsel %vm366, %v458, 0.0
  %v512 = vadd.f32 %v510, %v511
  %v513 = vsel %vm366, %v459, 0.0
  %v514 = vadd.f32 %v512, %v513
  %v515 = vsel %vm366, %v460, 0.0
  %v516 = vadd.f32 %v514, %v515
  %v517 = vsel %vm366, %v461, 0.0
  %v518 = vadd.f32 %v516, %v517
  %v519 = vsel %vm366, %v462, 0.0
  %v520 = vadd.f32 %v518, %v519
  %v521 = vsel %vm366, %v463, 0.0
  %v522 = vadd.f32 %v520, %v521
  %v523 = vsel %vm366, %v464, 0.0
  %v524 = vadd.f32 %v522, %v523
  %v525 = vsel %vm366, %v465, 0.0
  %v526 = vadd.f32 %v524, %v525
  %v527 = vsel %vm366, %v466, 0.0
  %v528 = vadd.f32 %v526, %v527
  %v529 = vsel %vm366, %v467, 0.0
  %v530 = vadd.f32 %v528, %v529
  %v531 = vrot.slane %v530, 4
  %v532 = vadd.f32 %v530, %v531
  %v533 = vrot.slane %v532, 2
  %v534 = vadd.f32 %v532, %v533
  %v535 = vrot.slane %v534, 1
  %v536 = vadd.f32 %v534, %v535
  %v537 = vlaneseq
  %v538 = vshrl.u32 %v537, 7
  %vm539 = vcmp.eq.s32.totalorder %v538, 0
  %v540 = vsel %vm539, %v435, %v536
  %vm541 = vcmask 254976
  %542 = vst.msk [vmem:[%s2] sm:$0x3] %vm541, %v540
  // Predicated region
  $region10: #{transition_down1.2} parent=0 // pred_check
    _
  $region11: #{transition_down1.2} parent=0 // pred_check_branch
    %544 = sbr.rel (0) target = $region13
  $region12: #{transition_down1.2} parent=0 // pred_region
    _
  $region13: #{transition_down1.2} parent=0 // pred_fallthru
    _
  // Predicated region
  $region14: #{transition_down1.2} parent=0 // pred_check
    _
  $region15: #{transition_down1.2} parent=0 // pred_check_branch
    %546 = sbr.rel (0) target = $region17
  $region16: #{transition_down1.2} parent=0 // pred_region
    _
  $region17: #{transition_down1.2} parent=0 // pred_fallthru
    _

// kernel: transition_down1.3
$region0: #{transition_down1.3}
  #allocation0 [shape = 'u32[]', space=smem, size = 0x4, offset = 0x4, fixed_abs, tag = 'smem constant byte address 0x4 - core index']
  #allocation1 [shape = 'u32[144,128]{1,0:T(1,128)}', space=vmem, size = 0x12000, scoped, tag = 'internal scratch']
  %s0 = inlined_call_operand.vmem [shape: f32[16,8,8], index: 0, kind: input, shape index: {}]
  %s1 = inlined_call_operand.vmem [shape: f32[8,32], index: 1, kind: input, shape index: {}]
  %s2 = inlined_call_operand.vmem [shape: f32[1,32], index: 2, kind: input, shape index: {}]
  %s3 = inlined_call_operand.vmem [shape: f32[8,32], index: 3, kind: output, shape index: {}]
  %s4 = sld [smem:[#allocation0]]
  $region22: #{transition_down1.3} parent=0
    _
  %s6 = ssub.s32 1, %s4
  %s7 = scalar_select 0, %s6, %s4
  // Predicated region
  $region2: #{transition_down1.3} parent=0 // pred_check
    _
  $region3: #{transition_down1.3} parent=0 // pred_check_branch
    %9 = sbr.rel (0) target = $region5
  $region4: #{transition_down1.3} parent=0 // pred_region
    _
  $region5: #{transition_down1.3} parent=0 // pred_fallthru
    _
  // Predicated region
  $region6: #{transition_down1.3} parent=0 // pred_check
    _
  $region7: #{transition_down1.3} parent=0 // pred_check_branch
    %11 = sbr.rel (0) target = $region9
  $region8: #{transition_down1.3} parent=0 // pred_region
    _
  $region9: #{transition_down1.3} parent=0 // pred_fallthru
    _
  // Predicated region
  $region10: #{transition_down1.3} parent=0 // pred_check
    _
  $region11: #{transition_down1.3} parent=0 // pred_check_branch
    %13 = sbr.rel (0) target = $region13
  $region12: #{transition_down1.3} parent=0 // pred_region
    _
  $region13: #{transition_down1.3} parent=0 // pred_fallthru
    _
  %v14 = vld [vmem:[%s1] sm:$0xff]
  %v15 = vld [vmem:[%s2] sm:$0x1]
  %v16 = vld [vmem:[%s0] sm:$0xff]
  %v18 = vlaneseq
  %v19 = vshrl.u32 %v18, 7
  %v20 = vsub.s32 0, %v19
  %v21 = vrot.slane %v15, %v20
  %vm23 = vcmask 64512
  %v25 = vsel %vm23, %v16, 0
  %27 = vmatprep.subr.mxu0 0.0
  %28 = vmatpush1.msra.mxu0 0.0
  %29 = vmatprep.subr.mxu0 0.0
  %30 = vmatpush1.msra.mxu0 0.0
  %31 = vmatprep.subr.mxu0 0.0
  %32 = vmatpush1.msra.mxu0 0.0
  %33 = vmatprep.subr.mxu0 0.0
  %34 = vmatpush1.msra.mxu0 0.0
  %35 = vmatprep.subr.mxu0 0.0
  %36 = vmatpush1.msra.mxu0 0.0
  %37 = vmatprep.subr.mxu0 0.0
  %38 = vmatpush1.msra.mxu0 0.0
  %39 = vmatprep.subr.mxu0 0.0
  %40 = vmatpush1.msra.mxu0 0.0
  %41 = vmatprep.subr.mxu0 0.0
  %42 = vmatpush1.msra.mxu0 0.0
  %43 = vmatprep.subr.mxu0 0.0
  %44 = vmatpush1.msra.mxu0 0.0
  %45 = vmatprep.subr.mxu0 0.0
  %46 = vmatpush1.msra.mxu0 0.0
  %47 = vmatprep.subr.mxu0 0.0
  %48 = vmatpush1.msra.mxu0 0.0
  %49 = vmatprep.subr.mxu0 0.0
  %50 = vmatpush1.msra.mxu0 0.0
  %51 = vmatprep.subr.mxu0 0.0
  %52 = vmatpush1.msra.mxu0 0.0
  %53 = vmatprep.subr.mxu0 0.0
  %54 = vmatpush1.msra.mxu0 0.0
  %55 = vmatprep.subr.mxu0 0.0
  %56 = vmatpush1.msra.mxu0 0.0
  %57 = vmatprep.subr.mxu0 0.0
  %58 = vmatpush1.msra.mxu0 %v14
  %59 = vmatprep.subr.mxu0 0.0
  %60 = vmatpush2.msra.mxu0 0.0
  %61 = vmatprep.subr.mxu0 0.0
  %62 = vmatpush2.msra.mxu0 0.0
  %63 = vmatprep.subr.mxu0 0.0
  %64 = vmatpush2.msra.mxu0 0.0
  %65 = vmatprep.subr.mxu0 0.0
  %66 = vmatpush2.msra.mxu0 0.0
  %67 = vmatprep.subr.mxu0 0.0
  %68 = vmatpush2.msra.mxu0 0.0
  %69 = vmatprep.subr.mxu0 0.0
  %70 = vmatpush2.msra.mxu0 0.0
  %71 = vmatprep.subr.mxu0 0.0
  %72 = vmatpush2.msra.mxu0 0.0
  %73 = vmatprep.subr.mxu0 0.0
  %74 = vmatpush2.msra.mxu0 0.0
  %75 = vmatprep.subr.mxu0 0.0
  %76 = vmatpush2.msra.mxu0 0.0
  %77 = vmatprep.subr.mxu0 0.0
  %78 = vmatpush2.msra.mxu0 0.0
  %79 = vmatprep.subr.mxu0 0.0
  %80 = vmatpush2.msra.mxu0 0.0
  %81 = vmatprep.subr.mxu0 0.0
  %82 = vmatpush2.msra.mxu0 0.0
  %83 = vmatprep.subr.mxu0 0.0
  %84 = vmatpush2.msra.mxu0 0.0
  %85 = vmatprep.subr.mxu0 0.0
  %86 = vmatpush2.msra.mxu0 0.0
  %87 = vmatprep.subr.mxu0 0.0
  %88 = vmatpush2.msra.mxu0 0.0
  %89 = vmatprep.subr.mxu0 0.0
  %90 = vmatpush2.msra.mxu0 0.0
  %91 = vmatprep.mubr.f32.mxu0 0.0
  %92 = vmatmul.mubr.f32.gmra.mxu0 %v25
  %v93 = vpop.f32.mrf.mxu0
  %v94 = vadd.f32 %v21, %v93
  %v95 = vpop.f32.mrf.mxu0
  %96 = vdwg.mxu0
  %v97 = vmax.f32 %v94, 0.0
  %s98 = scalar_lea.vmem %s0, 8
  %v99 = vld [vmem:[%s98] sm:$0xff]
  %v101 = vsel %vm23, %v99, 0
  %103 = vmatprep.subr.mxu0 0.0
  %104 = vmatpush1.msra.mxu0 0.0
  %105 = vmatprep.subr.mxu0 0.0
  %106 = vmatpush1.msra.mxu0 0.0
  %107 = vmatprep.subr.mxu0 0.0
  %108 = vmatpush1.msra.mxu0 0.0
  %109 = vmatprep.subr.mxu0 0.0
  %110 = vmatpush1.msra.mxu0 0.0
  %111 = vmatprep.subr.mxu0 0.0
  %112 = vmatpush1.msra.mxu0 0.0
  %113 = vmatprep.subr.mxu0 0.0
  %114 = vmatpush1.msra.mxu0 0.0
  %115 = vmatprep.subr.mxu0 0.0
  %116 = vmatpush1.msra.mxu0 0.0
  %117 = vmatprep.subr.mxu0 0.0
  %118 = vmatpush1.msra.mxu0 0.0
  %119 = vmatprep.subr.mxu0 0.0
  %120 = vmatpush1.msra.mxu0 0.0
  %121 = vmatprep.subr.mxu0 0.0
  %122 = vmatpush1.msra.mxu0 0.0
  %123 = vmatprep.subr.mxu0 0.0
  %124 = vmatpush1.msra.mxu0 0.0
  %125 = vmatprep.subr.mxu0 0.0
  %126 = vmatpush1.msra.mxu0 0.0
  %127 = vmatprep.subr.mxu0 0.0
  %128 = vmatpush1.msra.mxu0 0.0
  %129 = vmatprep.subr.mxu0 0.0
  %130 = vmatpush1.msra.mxu0 0.0
  %131 = vmatprep.subr.mxu0 0.0
  %132 = vmatpush1.msra.mxu0 0.0
  %133 = vmatprep.subr.mxu0 0.0
  %134 = vmatpush1.msra.mxu0 %v14
  %135 = vmatprep.subr.mxu0 0.0
  %136 = vmatpush2.msra.mxu0 0.0
  %137 = vmatprep.subr.mxu0 0.0
  %138 = vmatpush2.msra.mxu0 0.0
  %139 = vmatprep.subr.mxu0 0.0
  %140 = vmatpush2.msra.mxu0 0.0
  %141 = vmatprep.subr.mxu0 0.0
  %142 = vmatpush2.msra.mxu0 0.0
  %143 = vmatprep.subr.mxu0 0.0
  %144 = vmatpush2.msra.mxu0 0.0
  %145 = vmatprep.subr.mxu0 0.0
  %146 = vmatpush2.msra.mxu0 0.0
  %147 = vmatprep.subr.mxu0 0.0
  %148 = vmatpush2.msra.mxu0 0.0
  %149 = vmatprep.subr.mxu0 0.0
  %150 = vmatpush2.msra.mxu0 0.0
  %151 = vmatprep.subr.mxu0 0.0
  %152 = vmatpush2.msra.mxu0 0.0
  %153 = vmatprep.subr.mxu0 0.0
  %154 = vmatpush2.msra.mxu0 0.0
  %155 = vmatprep.subr.mxu0 0.0
  %156 = vmatpush2.msra.mxu0 0.0
  %157 = vmatprep.subr.mxu0 0.0
  %158 = vmatpush2.msra.mxu0 0.0
  %159 = vmatprep.subr.mxu0 0.0
  %160 = vmatpush2.msra.mxu0 0.0
  %161 = vmatprep.subr.mxu0 0.0
  %162 = vmatpush2.msra.mxu0 0.0
  %163 = vmatprep.subr.mxu0 0.0
  %164 = vmatpush2.msra.mxu0 0.0
  %165 = vmatprep.subr.mxu0 0.0
  %166 = vmatpush2.msra.mxu0 0.0
  %167 = vmatprep.mubr.f32.mxu0 0.0
  %168 = vmatmul.mubr.f32.gmra.mxu0 %v101
  %v169 = vpop.f32.mrf.mxu0
  %v170 = vadd.f32 %v21, %v169
  %v171 = vpop.f32.mrf.mxu0
  %172 = vdwg.mxu0
  %v173 = vmax.f32 %v170, 0.0
  %v174 = vmax.f32 %v97, %v173
  %s175 = scalar_lea.vmem %s0, 16
  %v176 = vld [vmem:[%s175] sm:$0xff]
  %v178 = vsel %vm23, %v176, 0
  %180 = vmatprep.subr.mxu0 0.0
  %181 = vmatpush1.msra.mxu0 0.0
  %182 = vmatprep.subr.mxu0 0.0
  %183 = vmatpush1.msra.mxu0 0.0
  %184 = vmatprep.subr.mxu0 0.0
  %185 = vmatpush1.msra.mxu0 0.0
  %186 = vmatprep.subr.mxu0 0.0
  %187 = vmatpush1.msra.mxu0 0.0
  %188 = vmatprep.subr.mxu0 0.0
  %189 = vmatpush1.msra.mxu0 0.0
  %190 = vmatprep.subr.mxu0 0.0
  %191 = vmatpush1.msra.mxu0 0.0
  %192 = vmatprep.subr.mxu0 0.0
  %193 = vmatpush1.msra.mxu0 0.0
  %194 = vmatprep.subr.mxu0 0.0
  %195 = vmatpush1.msra.mxu0 0.0
  %196 = vmatprep.subr.mxu0 0.0
  %197 = vmatpush1.msra.mxu0 0.0
  %198 = vmatprep.subr.mxu0 0.0
  %199 = vmatpush1.msra.mxu0 0.0
  %200 = vmatprep.subr.mxu0 0.0
  %201 = vmatpush1.msra.mxu0 0.0
  %202 = vmatprep.subr.mxu0 0.0
  %203 = vmatpush1.msra.mxu0 0.0
  %204 = vmatprep.subr.mxu0 0.0
  %205 = vmatpush1.msra.mxu0 0.0
  %206 = vmatprep.subr.mxu0 0.0
  %207 = vmatpush1.msra.mxu0 0.0
  %208 = vmatprep.subr.mxu0 0.0
  %209 = vmatpush1.msra.mxu0 0.0
  %210 = vmatprep.subr.mxu0 0.0
  %211 = vmatpush1.msra.mxu0 %v14
  %212 = vmatprep.subr.mxu0 0.0
  %213 = vmatpush2.msra.mxu0 0.0
  %214 = vmatprep.subr.mxu0 0.0
  %215 = vmatpush2.msra.mxu0 0.0
  %216 = vmatprep.subr.mxu0 0.0
  %217 = vmatpush2.msra.mxu0 0.0
  %218 = vmatprep.subr.mxu0 0.0
  %219 = vmatpush2.msra.mxu0 0.0
  %220 = vmatprep.subr.mxu0 0.0
  %221 = vmatpush2.msra.mxu0 0.0
  %222 = vmatprep.subr.mxu0 0.0
  %223 = vmatpush2.msra.mxu0 0.0
  %224 = vmatprep.subr.mxu0 0.0
  %225 = vmatpush2.msra.mxu0 0.0
  %226 = vmatprep.subr.mxu0 0.0
  %227 = vmatpush2.msra.mxu0 0.0
  %228 = vmatprep.subr.mxu0 0.0
  %229 = vmatpush2.msra.mxu0 0.0
  %230 = vmatprep.subr.mxu0 0.0
  %231 = vmatpush2.msra.mxu0 0.0
  %232 = vmatprep.subr.mxu0 0.0
  %233 = vmatpush2.msra.mxu0 0.0
  %234 = vmatprep.subr.mxu0 0.0
  %235 = vmatpush2.msra.mxu0 0.0
  %236 = vmatprep.subr.mxu0 0.0
  %237 = vmatpush2.msra.mxu0 0.0
  %238 = vmatprep.subr.mxu0 0.0
  %239 = vmatpush2.msra.mxu0 0.0
  %240 = vmatprep.subr.mxu0 0.0
  %241 = vmatpush2.msra.mxu0 0.0
  %242 = vmatprep.subr.mxu0 0.0
  %243 = vmatpush2.msra.mxu0 0.0
  %244 = vmatprep.mubr.f32.mxu0 0.0
  %245 = vmatmul.mubr.f32.gmra.mxu0 %v178
  %v246 = vpop.f32.mrf.mxu0
  %v247 = vadd.f32 %v21, %v246
  %v248 = vpop.f32.mrf.mxu0
  %249 = vdwg.mxu0
  %v250 = vmax.f32 %v247, 0.0
  %v251 = vmax.f32 %v174, %v250
  %s252 = scalar_lea.vmem %s0, 24
  %v253 = vld [vmem:[%s252] sm:$0xff]
  %v255 = vsel %vm23, %v253, 0
  %257 = vmatprep.subr.mxu0 0.0
  %258 = vmatpush1.msra.mxu0 0.0
  %259 = vmatprep.subr.mxu0 0.0
  %260 = vmatpush1.msra.mxu0 0.0
  %261 = vmatprep.subr.mxu0 0.0
  %262 = vmatpush1.msra.mxu0 0.0
  %263 = vmatprep.subr.mxu0 0.0
  %264 = vmatpush1.msra.mxu0 0.0
  %265 = vmatprep.subr.mxu0 0.0
  %266 = vmatpush1.msra.mxu0 0.0
  %267 = vmatprep.subr.mxu0 0.0
  %268 = vmatpush1.msra.mxu0 0.0
  %269 = vmatprep.subr.mxu0 0.0
  %270 = vmatpush1.msra.mxu0 0.0
  %271 = vmatprep.subr.mxu0 0.0
  %272 = vmatpush1.msra.mxu0 0.0
  %273 = vmatprep.subr.mxu0 0.0
  %274 = vmatpush1.msra.mxu0 0.0
  %275 = vmatprep.subr.mxu0 0.0
  %276 = vmatpush1.msra.mxu0 0.0
  %277 = vmatprep.subr.mxu0 0.0
  %278 = vmatpush1.msra.mxu0 0.0
  %279 = vmatprep.subr.mxu0 0.0
  %280 = vmatpush1.msra.mxu0 0.0
  %281 = vmatprep.subr.mxu0 0.0
  %282 = vmatpush1.msra.mxu0 0.0
  %283 = vmatprep.subr.mxu0 0.0
  %284 = vmatpush1.msra.mxu0 0.0
  %285 = vmatprep.subr.mxu0 0.0
  %286 = vmatpush1.msra.mxu0 0.0
  %287 = vmatprep.subr.mxu0 0.0
  %288 = vmatpush1.msra.mxu0 %v14
  %289 = vmatprep.subr.mxu0 0.0
  %290 = vmatpush2.msra.mxu0 0.0
  %291 = vmatprep.subr.mxu0 0.0
  %292 = vmatpush2.msra.mxu0 0.0
  %293 = vmatprep.subr.mxu0 0.0
  %294 = vmatpush2.msra.mxu0 0.0
  %295 = vmatprep.subr.mxu0 0.0
  %296 = vmatpush2.msra.mxu0 0.0
  %297 = vmatprep.subr.mxu0 0.0
  %298 = vmatpush2.msra.mxu0 0.0
  %299 = vmatprep.subr.mxu0 0.0
  %300 = vmatpush2.msra.mxu0 0.0
  %301 = vmatprep.subr.mxu0 0.0
  %302 = vmatpush2.msra.mxu0 0.0
  %303 = vmatprep.subr.mxu0 0.0
  %304 = vmatpush2.msra.mxu0 0.0
  %305 = vmatprep.subr.mxu0 0.0
  %306 = vmatpush2.msra.mxu0 0.0
  %307 = vmatprep.subr.mxu0 0.0
  %308 = vmatpush2.msra.mxu0 0.0
  %309 = vmatprep.subr.mxu0 0.0
  %310 = vmatpush2.msra.mxu0 0.0
  %311 = vmatprep.subr.mxu0 0.0
  %312 = vmatpush2.msra.mxu0 0.0
  %313 = vmatprep.subr.mxu0 0.0
  %314 = vmatpush2.msra.mxu0 0.0
  %315 = vmatprep.subr.mxu0 0.0
  %316 = vmatpush2.msra.mxu0 0.0
  %317 = vmatprep.subr.mxu0 0.0
  %318 = vmatpush2.msra.mxu0 0.0
  %319 = vmatprep.subr.mxu0 0.0
  %320 = vmatpush2.msra.mxu0 0.0
  %321 = vmatprep.mubr.f32.mxu0 0.0
  %322 = vmatmul.mubr.f32.gmra.mxu0 %v255
  %v323 = vpop.f32.mrf.mxu0
  %v324 = vadd.f32 %v21, %v323
  %v325 = vpop.f32.mrf.mxu0
  %326 = vdwg.mxu0
  %v327 = vmax.f32 %v324, 0.0
  %v328 = vmax.f32 %v251, %v327
  %s329 = scalar_lea.vmem %s0, 32
  %v330 = vld [vmem:[%s329] sm:$0xff]
  %v332 = vsel %vm23, %v330, 0
  %334 = vmatprep.subr.mxu0 0.0
  %335 = vmatpush1.msra.mxu0 0.0
  %336 = vmatprep.subr.mxu0 0.0
  %337 = vmatpush1.msra.mxu0 0.0
  %338 = vmatprep.subr.mxu0 0.0
  %339 = vmatpush1.msra.mxu0 0.0
  %340 = vmatprep.subr.mxu0 0.0
  %341 = vmatpush1.msra.mxu0 0.0
  %342 = vmatprep.subr.mxu0 0.0
  %343 = vmatpush1.msra.mxu0 0.0
  %344 = vmatprep.subr.mxu0 0.0
  %345 = vmatpush1.msra.mxu0 0.0
  %346 = vmatprep.subr.mxu0 0.0
  %347 = vmatpush1.msra.mxu0 0.0
  %348 = vmatprep.subr.mxu0 0.0
  %349 = vmatpush1.msra.mxu0 0.0
  %350 = vmatprep.subr.mxu0 0.0
  %351 = vmatpush1.msra.mxu0 0.0
  %352 = vmatprep.subr.mxu0 0.0
  %353 = vmatpush1.msra.mxu0 0.0
  %354 = vmatprep.subr.mxu0 0.0
  %355 = vmatpush1.msra.mxu0 0.0
  %356 = vmatprep.subr.mxu0 0.0
  %357 = vmatpush1.msra.mxu0 0.0
  %358 = vmatprep.subr.mxu0 0.0
  %359 = vmatpush1.msra.mxu0 0.0
  %360 = vmatprep.subr.mxu0 0.0
  %361 = vmatpush1.msra.mxu0 0.0
  %362 = vmatprep.subr.mxu0 0.0
  %363 = vmatpush1.msra.mxu0 0.0
  %364 = vmatprep.subr.mxu0 0.0
  %365 = vmatpush1.msra.mxu0 %v14
  %366 = vmatprep.subr.mxu0 0.0
  %367 = vmatpush2.msra.mxu0 0.0
  %368 = vmatprep.subr.mxu0 0.0
  %369 = vmatpush2.msra.mxu0 0.0
  %370 = vmatprep.subr.mxu0 0.0
  %371 = vmatpush2.msra.mxu0 0.0
  %372 = vmatprep.subr.mxu0 0.0
  %373 = vmatpush2.msra.mxu0 0.0
  %374 = vmatprep.subr.mxu0 0.0
  %375 = vmatpush2.msra.mxu0 0.0
  %376 = vmatprep.subr.mxu0 0.0
  %377 = vmatpush2.msra.mxu0 0.0
  %378 = vmatprep.subr.mxu0 0.0
  %379 = vmatpush2.msra.mxu0 0.0
  %380 = vmatprep.subr.mxu0 0.0
  %381 = vmatpush2.msra.mxu0 0.0
  %382 = vmatprep.subr.mxu0 0.0
  %383 = vmatpush2.msra.mxu0 0.0
  %384 = vmatprep.subr.mxu0 0.0
  %385 = vmatpush2.msra.mxu0 0.0
  %386 = vmatprep.subr.mxu0 0.0
  %387 = vmatpush2.msra.mxu0 0.0
  %388 = vmatprep.subr.mxu0 0.0
  %389 = vmatpush2.msra.mxu0 0.0
  %390 = vmatprep.subr.mxu0 0.0
  %391 = vmatpush2.msra.mxu0 0.0
  %392 = vmatprep.subr.mxu0 0.0
  %393 = vmatpush2.msra.mxu0 0.0
  %394 = vmatprep.subr.mxu0 0.0
  %395 = vmatpush2.msra.mxu0 0.0
  %396 = vmatprep.subr.mxu0 0.0
  %397 = vmatpush2.msra.mxu0 0.0
  %398 = vmatprep.mubr.f32.mxu0 0.0
  %399 = vmatmul.mubr.f32.gmra.mxu0 %v332
  %v400 = vpop.f32.mrf.mxu0
  %v401 = vadd.f32 %v21, %v400
  %v402 = vpop.f32.mrf.mxu0
  %403 = vdwg.mxu0
  %v404 = vmax.f32 %v401, 0.0
  %v405 = vmax.f32 %v328, %v404
  %s406 = scalar_lea.vmem %s0, 40
  %v407 = vld [vmem:[%s406] sm:$0xff]
  %v409 = vsel %vm23, %v407, 0
  %411 = vmatprep.subr.mxu0 0.0
  %412 = vmatpush1.msra.mxu0 0.0
  %413 = vmatprep.subr.mxu0 0.0
  %414 = vmatpush1.msra.mxu0 0.0
  %415 = vmatprep.subr.mxu0 0.0
  %416 = vmatpush1.msra.mxu0 0.0
  %417 = vmatprep.subr.mxu0 0.0
  %418 = vmatpush1.msra.mxu0 0.0
  %419 = vmatprep.subr.mxu0 0.0
  %420 = vmatpush1.msra.mxu0 0.0
  %421 = vmatprep.subr.mxu0 0.0
  %422 = vmatpush1.msra.mxu0 0.0
  %423 = vmatprep.subr.mxu0 0.0
  %424 = vmatpush1.msra.mxu0 0.0
  %425 = vmatprep.subr.mxu0 0.0
  %426 = vmatpush1.msra.mxu0 0.0
  %427 = vmatprep.subr.mxu0 0.0
  %428 = vmatpush1.msra.mxu0 0.0
  %429 = vmatprep.subr.mxu0 0.0
  %430 = vmatpush1.msra.mxu0 0.0
  %431 = vmatprep.subr.mxu0 0.0
  %432 = vmatpush1.msra.mxu0 0.0
  %433 = vmatprep.subr.mxu0 0.0
  %434 = vmatpush1.msra.mxu0 0.0
  %435 = vmatprep.subr.mxu0 0.0
  %436 = vmatpush1.msra.mxu0 0.0
  %437 = vmatprep.subr.mxu0 0.0
  %438 = vmatpush1.msra.mxu0 0.0
  %439 = vmatprep.subr.mxu0 0.0
  %440 = vmatpush1.msra.mxu0 0.0
  %441 = vmatprep.subr.mxu0 0.0
  %442 = vmatpush1.msra.mxu0 %v14
  %443 = vmatprep.subr.mxu0 0.0
  %444 = vmatpush2.msra.mxu0 0.0
  %445 = vmatprep.subr.mxu0 0.0
  %446 = vmatpush2.msra.mxu0 0.0
  %447 = vmatprep.subr.mxu0 0.0
  %448 = vmatpush2.msra.mxu0 0.0
  %449 = vmatprep.subr.mxu0 0.0
  %450 = vmatpush2.msra.mxu0 0.0
  %451 = vmatprep.subr.mxu0 0.0
  %452 = vmatpush2.msra.mxu0 0.0
  %453 = vmatprep.subr.mxu0 0.0
  %454 = vmatpush2.msra.mxu0 0.0
  %455 = vmatprep.subr.mxu0 0.0
  %456 = vmatpush2.msra.mxu0 0.0
  %457 = vmatprep.subr.mxu0 0.0
  %458 = vmatpush2.msra.mxu0 0.0
  %459 = vmatprep.subr.mxu0 0.0
  %460 = vmatpush2.msra.mxu0 0.0
  %461 = vmatprep.subr.mxu0 0.0
  %462 = vmatpush2.msra.mxu0 0.0
  %463 = vmatprep.subr.mxu0 0.0
  %464 = vmatpush2.msra.mxu0 0.0
  %465 = vmatprep.subr.mxu0 0.0
  %466 = vmatpush2.msra.mxu0 0.0
  %467 = vmatprep.subr.mxu0 0.0
  %468 = vmatpush2.msra.mxu0 0.0
  %469 = vmatprep.subr.mxu0 0.0
  %470 = vmatpush2.msra.mxu0 0.0
  %471 = vmatprep.subr.mxu0 0.0
  %472 = vmatpush2.msra.mxu0 0.0
  %473 = vmatprep.subr.mxu0 0.0
  %474 = vmatpush2.msra.mxu0 0.0
  %475 = vmatprep.mubr.f32.mxu0 0.0
  %476 = vmatmul.mubr.f32.gmra.mxu0 %v409
  %v477 = vpop.f32.mrf.mxu0
  %v478 = vadd.f32 %v21, %v477
  %v479 = vpop.f32.mrf.mxu0
  %480 = vdwg.mxu0
  %v481 = vmax.f32 %v478, 0.0
  %v482 = vmax.f32 %v405, %v481
  %s483 = scalar_lea.vmem %s0, 48
  %v484 = vld [vmem:[%s483] sm:$0xff]
  %v486 = vsel %vm23, %v484, 0
  %488 = vmatprep.subr.mxu0 0.0
  %489 = vmatpush1.msra.mxu0 0.0
  %490 = vmatprep.subr.mxu0 0.0
  %491 = vmatpush1.msra.mxu0 0.0
  %492 = vmatprep.subr.mxu0 0.0
  %493 = vmatpush1.msra.mxu0 0.0
  %494 = vmatprep.subr.mxu0 0.0
  %495 = vmatpush1.msra.mxu0 0.0
  %496 = vmatprep.subr.mxu0 0.0
  %497 = vmatpush1.msra.mxu0 0.0
  %498 = vmatprep.subr.mxu0 0.0
  %499 = vmatpush1.msra.mxu0 0.0
  %500 = vmatprep.subr.mxu0 0.0
  %501 = vmatpush1.msra.mxu0 0.0
  %502 = vmatprep.subr.mxu0 0.0
  %503 = vmatpush1.msra.mxu0 0.0
  %504 = vmatprep.subr.mxu0 0.0
  %505 = vmatpush1.msra.mxu0 0.0
  %506 = vmatprep.subr.mxu0 0.0
  %507 = vmatpush1.msra.mxu0 0.0
  %508 = vmatprep.subr.mxu0 0.0
  %509 = vmatpush1.msra.mxu0 0.0
  %510 = vmatprep.subr.mxu0 0.0
  %511 = vmatpush1.msra.mxu0 0.0
  %512 = vmatprep.subr.mxu0 0.0
  %513 = vmatpush1.msra.mxu0 0.0
  %514 = vmatprep.subr.mxu0 0.0
  %515 = vmatpush1.msra.mxu0 0.0
  %516 = vmatprep.subr.mxu0 0.0
  %517 = vmatpush1.msra.mxu0 0.0
  %518 = vmatprep.subr.mxu0 0.0
  %519 = vmatpush1.msra.mxu0 %v14
  %520 = vmatprep.subr.mxu0 0.0
  %521 = vmatpush2.msra.mxu0 0.0
  %522 = vmatprep.subr.mxu0 0.0
  %523 = vmatpush2.msra.mxu0 0.0
  %524 = vmatprep.subr.mxu0 0.0
  %525 = vmatpush2.msra.mxu0 0.0
  %526 = vmatprep.subr.mxu0 0.0
  %527 = vmatpush2.msra.mxu0 0.0
  %528 = vmatprep.subr.mxu0 0.0
  %529 = vmatpush2.msra.mxu0 0.0
  %530 = vmatprep.subr.mxu0 0.0
  %531 = vmatpush2.msra.mxu0 0.0
  %532 = vmatprep.subr.mxu0 0.0
  %533 = vmatpush2.msra.mxu0 0.0
  %534 = vmatprep.subr.mxu0 0.0
  %535 = vmatpush2.msra.mxu0 0.0
  %536 = vmatprep.subr.mxu0 0.0
  %537 = vmatpush2.msra.mxu0 0.0
  %538 = vmatprep.subr.mxu0 0.0
  %539 = vmatpush2.msra.mxu0 0.0
  %540 = vmatprep.subr.mxu0 0.0
  %541 = vmatpush2.msra.mxu0 0.0
  %542 = vmatprep.subr.mxu0 0.0
  %543 = vmatpush2.msra.mxu0 0.0
  %544 = vmatprep.subr.mxu0 0.0
  %545 = vmatpush2.msra.mxu0 0.0
  %546 = vmatprep.subr.mxu0 0.0
  %547 = vmatpush2.msra.mxu0 0.0
  %548 = vmatprep.subr.mxu0 0.0
  %549 = vmatpush2.msra.mxu0 0.0
  %550 = vmatprep.subr.mxu0 0.0
  %551 = vmatpush2.msra.mxu0 0.0
  %552 = vmatprep.mubr.f32.mxu0 0.0
  %553 = vmatmul.mubr.f32.gmra.mxu0 %v486
  %v554 = vpop.f32.mrf.mxu0
  %v555 = vadd.f32 %v21, %v554
  %v556 = vpop.f32.mrf.mxu0
  %557 = vdwg.mxu0
  %v558 = vmax.f32 %v555, 0.0
  %v559 = vmax.f32 %v482, %v558
  %s560 = scalar_lea.vmem %s0, 56
  %v561 = vld [vmem:[%s560] sm:$0xff]
  %v563 = vsel %vm23, %v561, 0
  %565 = vmatprep.subr.mxu0 0.0
  %566 = vmatpush1.msra.mxu0 0.0
  %567 = vmatprep.subr.mxu0 0.0
  %568 = vmatpush1.msra.mxu0 0.0
  %569 = vmatprep.subr.mxu0 0.0
  %570 = vmatpush1.msra.mxu0 0.0
  %571 = vmatprep.subr.mxu0 0.0
  %572 = vmatpush1.msra.mxu0 0.0
  %573 = vmatprep.subr.mxu0 0.0
  %574 = vmatpush1.msra.mxu0 0.0
  %575 = vmatprep.subr.mxu0 0.0
  %576 = vmatpush1.msra.mxu0 0.0
  %577 = vmatprep.subr.mxu0 0.0
  %578 = vmatpush1.msra.mxu0 0.0
  %579 = vmatprep.subr.mxu0 0.0
  %580 = vmatpush1.msra.mxu0 0.0
  %581 = vmatprep.subr.mxu0 0.0
  %582 = vmatpush1.msra.mxu0 0.0
  %583 = vmatprep.subr.mxu0 0.0
  %584 = vmatpush1.msra.mxu0 0.0
  %585 = vmatprep.subr.mxu0 0.0
  %586 = vmatpush1.msra.mxu0 0.0
  %587 = vmatprep.subr.mxu0 0.0
  %588 = vmatpush1.msra.mxu0 0.0
  %589 = vmatprep.subr.mxu0 0.0
  %590 = vmatpush1.msra.mxu0 0.0
  %591 = vmatprep.subr.mxu0 0.0
  %592 = vmatpush1.msra.mxu0 0.0
  %593 = vmatprep.subr.mxu0 0.0
  %594 = vmatpush1.msra.mxu0 0.0
  %595 = vmatprep.subr.mxu0 0.0
  %596 = vmatpush1.msra.mxu0 %v14
  %597 = vmatprep.subr.mxu0 0.0
  %598 = vmatpush2.msra.mxu0 0.0
  %599 = vmatprep.subr.mxu0 0.0
  %600 = vmatpush2.msra.mxu0 0.0
  %601 = vmatprep.subr.mxu0 0.0
  %602 = vmatpush2.msra.mxu0 0.0
  %603 = vmatprep.subr.mxu0 0.0
  %604 = vmatpush2.msra.mxu0 0.0
  %605 = vmatprep.subr.mxu0 0.0
  %606 = vmatpush2.msra.mxu0 0.0
  %607 = vmatprep.subr.mxu0 0.0
  %608 = vmatpush2.msra.mxu0 0.0
  %609 = vmatprep.subr.mxu0 0.0
  %610 = vmatpush2.msra.mxu0 0.0
  %611 = vmatprep.subr.mxu0 0.0
  %612 = vmatpush2.msra.mxu0 0.0
  %613 = vmatprep.subr.mxu0 0.0
  %614 = vmatpush2.msra.mxu0 0.0
  %615 = vmatprep.subr.mxu0 0.0
  %616 = vmatpush2.msra.mxu0 0.0
  %617 = vmatprep.subr.mxu0 0.0
  %618 = vmatpush2.msra.mxu0 0.0
  %619 = vmatprep.subr.mxu0 0.0
  %620 = vmatpush2.msra.mxu0 0.0
  %621 = vmatprep.subr.mxu0 0.0
  %622 = vmatpush2.msra.mxu0 0.0
  %623 = vmatprep.subr.mxu0 0.0
  %624 = vmatpush2.msra.mxu0 0.0
  %625 = vmatprep.subr.mxu0 0.0
  %626 = vmatpush2.msra.mxu0 0.0
  %627 = vmatprep.subr.mxu0 0.0
  %628 = vmatpush2.msra.mxu0 0.0
  %629 = vmatprep.mubr.f32.mxu0 0.0
  %630 = vmatmul.mubr.f32.gmra.mxu0 %v563
  %v631 = vpop.f32.mrf.mxu0
  %v632 = vadd.f32 %v21, %v631
  %v633 = vpop.f32.mrf.mxu0
  %634 = vdwg.mxu0
  %v635 = vmax.f32 %v632, 0.0
  %v636 = vmax.f32 %v559, %v635
  %s637 = scalar_lea.vmem %s0, 64
  %v638 = vld [vmem:[%s637] sm:$0xff]
  %v640 = vsel %vm23, %v638, 0
  %642 = vmatprep.subr.mxu0 0.0
  %643 = vmatpush1.msra.mxu0 0.0
  %644 = vmatprep.subr.mxu0 0.0
  %645 = vmatpush1.msra.mxu0 0.0
  %646 = vmatprep.subr.mxu0 0.0
  %647 = vmatpush1.msra.mxu0 0.0
  %648 = vmatprep.subr.mxu0 0.0
  %649 = vmatpush1.msra.mxu0 0.0
  %650 = vmatprep.subr.mxu0 0.0
  %651 = vmatpush1.msra.mxu0 0.0
  %652 = vmatprep.subr.mxu0 0.0
  %653 = vmatpush1.msra.mxu0 0.0
  %654 = vmatprep.subr.mxu0 0.0
  %655 = vmatpush1.msra.mxu0 0.0
  %656 = vmatprep.subr.mxu0 0.0
  %657 = vmatpush1.msra.mxu0 0.0
  %658 = vmatprep.subr.mxu0 0.0
  %659 = vmatpush1.msra.mxu0 0.0
  %660 = vmatprep.subr.mxu0 0.0
  %661 = vmatpush1.msra.mxu0 0.0
  %662 = vmatprep.subr.mxu0 0.0
  %663 = vmatpush1.msra.mxu0 0.0
  %664 = vmatprep.subr.mxu0 0.0
  %665 = vmatpush1.msra.mxu0 0.0
  %666 = vmatprep.subr.mxu0 0.0
  %667 = vmatpush1.msra.mxu0 0.0
  %668 = vmatprep.subr.mxu0 0.0
  %669 = vmatpush1.msra.mxu0 0.0
  %670 = vmatprep.subr.mxu0 0.0
  %671 = vmatpush1.msra.mxu0 0.0
  %672 = vmatprep.subr.mxu0 0.0
  %673 = vmatpush1.msra.mxu0 %v14
  %674 = vmatprep.subr.mxu0 0.0
  %675 = vmatpush2.msra.mxu0 0.0
  %676 = vmatprep.subr.mxu0 0.0
  %677 = vmatpush2.msra.mxu0 0.0
  %678 = vmatprep.subr.mxu0 0.0
  %679 = vmatpush2.msra.mxu0 0.0
  %680 = vmatprep.subr.mxu0 0.0
  %681 = vmatpush2.msra.mxu0 0.0
  %682 = vmatprep.subr.mxu0 0.0
  %683 = vmatpush2.msra.mxu0 0.0
  %684 = vmatprep.subr.mxu0 0.0
  %685 = vmatpush2.msra.mxu0 0.0
  %686 = vmatprep.subr.mxu0 0.0
  %687 = vmatpush2.msra.mxu0 0.0
  %688 = vmatprep.subr.mxu0 0.0
  %689 = vmatpush2.msra.mxu0 0.0
  %690 = vmatprep.subr.mxu0 0.0
  %691 = vmatpush2.msra.mxu0 0.0
  %692 = vmatprep.subr.mxu0 0.0
  %693 = vmatpush2.msra.mxu0 0.0
  %694 = vmatprep.subr.mxu0 0.0
  %695 = vmatpush2.msra.mxu0 0.0
  %696 = vmatprep.subr.mxu0 0.0
  %697 = vmatpush2.msra.mxu0 0.0
  %698 = vmatprep.subr.mxu0 0.0
  %699 = vmatpush2.msra.mxu0 0.0
  %700 = vmatprep.subr.mxu0 0.0
  %701 = vmatpush2.msra.mxu0 0.0
  %702 = vmatprep.subr.mxu0 0.0
  %703 = vmatpush2.msra.mxu0 0.0
  %704 = vmatprep.subr.mxu0 0.0
  %705 = vmatpush2.msra.mxu0 0.0
  %706 = vmatprep.mubr.f32.mxu0 0.0
  %707 = vmatmul.mubr.f32.gmra.mxu0 %v640
  %v708 = vpop.f32.mrf.mxu0
  %v709 = vadd.f32 %v21, %v708
  %v710 = vpop.f32.mrf.mxu0
  %711 = vdwg.mxu0
  %v712 = vmax.f32 %v709, 0.0
  %v713 = vmax.f32 %v636, %v712
  %s714 = scalar_lea.vmem %s0, 72
  %v715 = vld [vmem:[%s714] sm:$0xff]
  %v717 = vsel %vm23, %v715, 0
  %719 = vmatprep.subr.mxu0 0.0
  %720 = vmatpush1.msra.mxu0 0.0
  %721 = vmatprep.subr.mxu0 0.0
  %722 = vmatpush1.msra.mxu0 0.0
  %723 = vmatprep.subr.mxu0 0.0
  %724 = vmatpush1.msra.mxu0 0.0
  %725 = vmatprep.subr.mxu0 0.0
  %726 = vmatpush1.msra.mxu0 0.0
  %727 = vmatprep.subr.mxu0 0.0
  %728 = vmatpush1.msra.mxu0 0.0
  %729 = vmatprep.subr.mxu0 0.0
  %730 = vmatpush1.msra.mxu0 0.0
  %731 = vmatprep.subr.mxu0 0.0
  %732 = vmatpush1.msra.mxu0 0.0
  %733 = vmatprep.subr.mxu0 0.0
  %734 = vmatpush1.msra.mxu0 0.0
  %735 = vmatprep.subr.mxu0 0.0
  %736 = vmatpush1.msra.mxu0 0.0
  %737 = vmatprep.subr.mxu0 0.0
  %738 = vmatpush1.msra.mxu0 0.0
  %739 = vmatprep.subr.mxu0 0.0
  %740 = vmatpush1.msra.mxu0 0.0
  %741 = vmatprep.subr.mxu0 0.0
  %742 = vmatpush1.msra.mxu0 0.0
  %743 = vmatprep.subr.mxu0 0.0
  %744 = vmatpush1.msra.mxu0 0.0
  %745 = vmatprep.subr.mxu0 0.0
  %746 = vmatpush1.msra.mxu0 0.0
  %747 = vmatprep.subr.mxu0 0.0
  %748 = vmatpush1.msra.mxu0 0.0
  %749 = vmatprep.subr.mxu0 0.0
  %750 = vmatpush1.msra.mxu0 %v14
  %751 = vmatprep.subr.mxu0 0.0
  %752 = vmatpush2.msra.mxu0 0.0
  %753 = vmatprep.subr.mxu0 0.0
  %754 = vmatpush2.msra.mxu0 0.0
  %755 = vmatprep.subr.mxu0 0.0
  %756 = vmatpush2.msra.mxu0 0.0
  %757 = vmatprep.subr.mxu0 0.0
  %758 = vmatpush2.msra.mxu0 0.0
  %759 = vmatprep.subr.mxu0 0.0
  %760 = vmatpush2.msra.mxu0 0.0
  %761 = vmatprep.subr.mxu0 0.0
  %762 = vmatpush2.msra.mxu0 0.0
  %763 = vmatprep.subr.mxu0 0.0
  %764 = vmatpush2.msra.mxu0 0.0
  %765 = vmatprep.subr.mxu0 0.0
  %766 = vmatpush2.msra.mxu0 0.0
  %767 = vmatprep.subr.mxu0 0.0
  %768 = vmatpush2.msra.mxu0 0.0
  %769 = vmatprep.subr.mxu0 0.0
  %770 = vmatpush2.msra.mxu0 0.0
  %771 = vmatprep.subr.mxu0 0.0
  %772 = vmatpush2.msra.mxu0 0.0
  %773 = vmatprep.subr.mxu0 0.0
  %774 = vmatpush2.msra.mxu0 0.0
  %775 = vmatprep.subr.mxu0 0.0
  %776 = vmatpush2.msra.mxu0 0.0
  %777 = vmatprep.subr.mxu0 0.0
  %778 = vmatpush2.msra.mxu0 0.0
  %779 = vmatprep.subr.mxu0 0.0
  %780 = vmatpush2.msra.mxu0 0.0
  %781 = vmatprep.subr.mxu0 0.0
  %782 = vmatpush2.msra.mxu0 0.0
  %783 = vmatprep.mubr.f32.mxu0 0.0
  %784 = vmatmul.mubr.f32.gmra.mxu0 %v717
  %v785 = vpop.f32.mrf.mxu0
  %v786 = vadd.f32 %v21, %v785
  %v787 = vpop.f32.mrf.mxu0
  %788 = vdwg.mxu0
  %v789 = vmax.f32 %v786, 0.0
  %v790 = vmax.f32 %v713, %v789
  %s791 = scalar_lea.vmem %s0, 80
  %v792 = vld [vmem:[%s791] sm:$0xff]
  %v794 = vsel %vm23, %v792, 0
  %796 = vmatprep.subr.mxu0 0.0
  %797 = vmatpush1.msra.mxu0 0.0
  %798 = vmatprep.subr.mxu0 0.0
  %799 = vmatpush1.msra.mxu0 0.0
  %800 = vmatprep.subr.mxu0 0.0
  %801 = vmatpush1.msra.mxu0 0.0
  %802 = vmatprep.subr.mxu0 0.0
  %803 = vmatpush1.msra.mxu0 0.0
  %804 = vmatprep.subr.mxu0 0.0
  %805 = vmatpush1.msra.mxu0 0.0
  %806 = vmatprep.subr.mxu0 0.0
  %807 = vmatpush1.msra.mxu0 0.0
  %808 = vmatprep.subr.mxu0 0.0
  %809 = vmatpush1.msra.mxu0 0.0
  %810 = vmatprep.subr.mxu0 0.0
  %811 = vmatpush1.msra.mxu0 0.0
  %812 = vmatprep.subr.mxu0 0.0
  %813 = vmatpush1.msra.mxu0 0.0
  %814 = vmatprep.subr.mxu0 0.0
  %815 = vmatpush1.msra.mxu0 0.0
  %816 = vmatprep.subr.mxu0 0.0
  %817 = vmatpush1.msra.mxu0 0.0
  %818 = vmatprep.subr.mxu0 0.0
  %819 = vmatpush1.msra.mxu0 0.0
  %820 = vmatprep.subr.mxu0 0.0
  %821 = vmatpush1.msra.mxu0 0.0
  %822 = vmatprep.subr.mxu0 0.0
  %823 = vmatpush1.msra.mxu0 0.0
  %824 = vmatprep.subr.mxu0 0.0
  %825 = vmatpush1.msra.mxu0 0.0
  %826 = vmatprep.subr.mxu0 0.0
  %827 = vmatpush1.msra.mxu0 %v14
  %828 = vmatprep.subr.mxu0 0.0
  %829 = vmatpush2.msra.mxu0 0.0
  %830 = vmatprep.subr.mxu0 0.0
  %831 = vmatpush2.msra.mxu0 0.0
  %832 = vmatprep.subr.mxu0 0.0
  %833 = vmatpush2.msra.mxu0 0.0
  %834 = vmatprep.subr.mxu0 0.0
  %835 = vmatpush2.msra.mxu0 0.0
  %836 = vmatprep.subr.mxu0 0.0
  %837 = vmatpush2.msra.mxu0 0.0
  %838 = vmatprep.subr.mxu0 0.0
  %839 = vmatpush2.msra.mxu0 0.0
  %840 = vmatprep.subr.mxu0 0.0
  %841 = vmatpush2.msra.mxu0 0.0
  %842 = vmatprep.subr.mxu0 0.0
  %843 = vmatpush2.msra.mxu0 0.0
  %844 = vmatprep.subr.mxu0 0.0
  %845 = vmatpush2.msra.mxu0 0.0
  %846 = vmatprep.subr.mxu0 0.0
  %847 = vmatpush2.msra.mxu0 0.0
  %848 = vmatprep.subr.mxu0 0.0
  %849 = vmatpush2.msra.mxu0 0.0
  %850 = vmatprep.subr.mxu0 0.0
  %851 = vmatpush2.msra.mxu0 0.0
  %852 = vmatprep.subr.mxu0 0.0
  %853 = vmatpush2.msra.mxu0 0.0
  %854 = vmatprep.subr.mxu0 0.0
  %855 = vmatpush2.msra.mxu0 0.0
  %856 = vmatprep.subr.mxu0 0.0
  %857 = vmatpush2.msra.mxu0 0.0
  %858 = vmatprep.subr.mxu0 0.0
  %859 = vmatpush2.msra.mxu0 0.0
  %860 = vmatprep.mubr.f32.mxu0 0.0
  %861 = vmatmul.mubr.f32.gmra.mxu0 %v794
  %v862 = vpop.f32.mrf.mxu0
  %v863 = vadd.f32 %v21, %v862
  %v864 = vpop.f32.mrf.mxu0
  %865 = vdwg.mxu0
  %v866 = vmax.f32 %v863, 0.0
  %v867 = vmax.f32 %v790, %v866
  %s868 = scalar_lea.vmem %s0, 88
  %v869 = vld [vmem:[%s868] sm:$0xff]
  %v871 = vsel %vm23, %v869, 0
  %873 = vmatprep.subr.mxu0 0.0
  %874 = vmatpush1.msra.mxu0 0.0
  %875 = vmatprep.subr.mxu0 0.0
  %876 = vmatpush1.msra.mxu0 0.0
  %877 = vmatprep.subr.mxu0 0.0
  %878 = vmatpush1.msra.mxu0 0.0
  %879 = vmatprep.subr.mxu0 0.0
  %880 = vmatpush1.msra.mxu0 0.0
  %881 = vmatprep.subr.mxu0 0.0
  %882 = vmatpush1.msra.mxu0 0.0
  %883 = vmatprep.subr.mxu0 0.0
  %884 = vmatpush1.msra.mxu0 0.0
  %885 = vmatprep.subr.mxu0 0.0
  %886 = vmatpush1.msra.mxu0 0.0
  %887 = vmatprep.subr.mxu0 0.0
  %888 = vmatpush1.msra.mxu0 0.0
  %889 = vmatprep.subr.mxu0 0.0
  %890 = vmatpush1.msra.mxu0 0.0
  %891 = vmatprep.subr.mxu0 0.0
  %892 = vmatpush1.msra.mxu0 0.0
  %893 = vmatprep.subr.mxu0 0.0
  %894 = vmatpush1.msra.mxu0 0.0
  %895 = vmatprep.subr.mxu0 0.0
  %896 = vmatpush1.msra.mxu0 0.0
  %897 = vmatprep.subr.mxu0 0.0
  %898 = vmatpush1.msra.mxu0 0.0
  %899 = vmatprep.subr.mxu0 0.0
  %900 = vmatpush1.msra.mxu0 0.0
  %901 = vmatprep.subr.mxu0 0.0
  %902 = vmatpush1.msra.mxu0 0.0
  %903 = vmatprep.subr.mxu0 0.0
  %904 = vmatpush1.msra.mxu0 %v14
  %905 = vmatprep.subr.mxu0 0.0
  %906 = vmatpush2.msra.mxu0 0.0
  %907 = vmatprep.subr.mxu0 0.0
  %908 = vmatpush2.msra.mxu0 0.0
  %909 = vmatprep.subr.mxu0 0.0
  %910 = vmatpush2.msra.mxu0 0.0
  %911 = vmatprep.subr.mxu0 0.0
  %912 = vmatpush2.msra.mxu0 0.0
  %913 = vmatprep.subr.mxu0 0.0
  %914 = vmatpush2.msra.mxu0 0.0
  %915 = vmatprep.subr.mxu0 0.0
  %916 = vmatpush2.msra.mxu0 0.0
  %917 = vmatprep.subr.mxu0 0.0
  %918 = vmatpush2.msra.mxu0 0.0
  %919 = vmatprep.subr.mxu0 0.0
  %920 = vmatpush2.msra.mxu0 0.0
  %921 = vmatprep.subr.mxu0 0.0
  %922 = vmatpush2.msra.mxu0 0.0
  %923 = vmatprep.subr.mxu0 0.0
  %924 = vmatpush2.msra.mxu0 0.0
  %925 = vmatprep.subr.mxu0 0.0
  %926 = vmatpush2.msra.mxu0 0.0
  %927 = vmatprep.subr.mxu0 0.0
  %928 = vmatpush2.msra.mxu0 0.0
  %929 = vmatprep.subr.mxu0 0.0
  %930 = vmatpush2.msra.mxu0 0.0
  %931 = vmatprep.subr.mxu0 0.0
  %932 = vmatpush2.msra.mxu0 0.0
  %933 = vmatprep.subr.mxu0 0.0
  %934 = vmatpush2.msra.mxu0 0.0
  %935 = vmatprep.subr.mxu0 0.0
  %936 = vmatpush2.msra.mxu0 0.0
  %937 = vmatprep.mubr.f32.mxu0 0.0
  %938 = vmatmul.mubr.f32.gmra.mxu0 %v871
  %v939 = vpop.f32.mrf.mxu0
  %v940 = vadd.f32 %v21, %v939
  %v941 = vpop.f32.mrf.mxu0
  %942 = vdwg.mxu0
  %v943 = vmax.f32 %v940, 0.0
  %v944 = vmax.f32 %v867, %v943
  %s945 = scalar_lea.vmem %s0, 96
  %v946 = vld [vmem:[%s945] sm:$0xff]
  %v948 = vsel %vm23, %v946, 0
  %950 = vmatprep.subr.mxu0 0.0
  %951 = vmatpush1.msra.mxu0 0.0
  %952 = vmatprep.subr.mxu0 0.0
  %953 = vmatpush1.msra.mxu0 0.0
  %954 = vmatprep.subr.mxu0 0.0
  %955 = vmatpush1.msra.mxu0 0.0
  %956 = vmatprep.subr.mxu0 0.0
  %957 = vmatpush1.msra.mxu0 0.0
  %958 = vmatprep.subr.mxu0 0.0
  %959 = vmatpush1.msra.mxu0 0.0
  %960 = vmatprep.subr.mxu0 0.0
  %961 = vmatpush1.msra.mxu0 0.0
  %962 = vmatprep.subr.mxu0 0.0
  %963 = vmatpush1.msra.mxu0 0.0
  %964 = vmatprep.subr.mxu0 0.0
  %965 = vmatpush1.msra.mxu0 0.0
  %966 = vmatprep.subr.mxu0 0.0
  %967 = vmatpush1.msra.mxu0 0.0
  %968 = vmatprep.subr.mxu0 0.0
  %969 = vmatpush1.msra.mxu0 0.0
  %970 = vmatprep.subr.mxu0 0.0
  %971 = vmatpush1.msra.mxu0 0.0
  %972 = vmatprep.subr.mxu0 0.0
  %973 = vmatpush1.msra.mxu0 0.0
  %974 = vmatprep.subr.mxu0 0.0
  %975 = vmatpush1.msra.mxu0 0.0
  %976 = vmatprep.subr.mxu0 0.0
  %977 = vmatpush1.msra.mxu0 0.0
  %978 = vmatprep.subr.mxu0 0.0
  %979 = vmatpush1.msra.mxu0 0.0
  %980 = vmatprep.subr.mxu0 0.0
  %981 = vmatpush1.msra.mxu0 %v14
  %982 = vmatprep.subr.mxu0 0.0
  %983 = vmatpush2.msra.mxu0 0.0
  %984 = vmatprep.subr.mxu0 0.0
  %985 = vmatpush2.msra.mxu0 0.0
  %986 = vmatprep.subr.mxu0 0.0
  %987 = vmatpush2.msra.mxu0 0.0
  %988 = vmatprep.subr.mxu0 0.0
  %989 = vmatpush2.msra.mxu0 0.0
  %990 = vmatprep.subr.mxu0 0.0
  %991 = vmatpush2.msra.mxu0 0.0
  %992 = vmatprep.subr.mxu0 0.0
  %993 = vmatpush2.msra.mxu0 0.0
  %994 = vmatprep.subr.mxu0 0.0
  %995 = vmatpush2.msra.mxu0 0.0
  %996 = vmatprep.subr.mxu0 0.0
  %997 = vmatpush2.msra.mxu0 0.0
  %998 = vmatprep.subr.mxu0 0.0
  %999 = vmatpush2.msra.mxu0 0.0
  %1000 = vmatprep.subr.mxu0 0.0
  %1001 = vmatpush2.msra.mxu0 0.0
  %1002 = vmatprep.subr.mxu0 0.0
  %1003 = vmatpush2.msra.mxu0 0.0
  %1004 = vmatprep.subr.mxu0 0.0
  %1005 = vmatpush2.msra.mxu0 0.0
  %1006 = vmatprep.subr.mxu0 0.0
  %1007 = vmatpush2.msra.mxu0 0.0
  %1008 = vmatprep.subr.mxu0 0.0
  %1009 = vmatpush2.msra.mxu0 0.0
  %1010 = vmatprep.subr.mxu0 0.0
  %1011 = vmatpush2.msra.mxu0 0.0
  %1012 = vmatprep.subr.mxu0 0.0
  %1013 = vmatpush2.msra.mxu0 0.0
  %1014 = vmatprep.mubr.f32.mxu0 0.0
  %1015 = vmatmul.mubr.f32.gmra.mxu0 %v948
  %v1016 = vpop.f32.mrf.mxu0
  %v1017 = vadd.f32 %v21, %v1016
  %v1018 = vpop.f32.mrf.mxu0
  %1019 = vdwg.mxu0
  %v1020 = vmax.f32 %v1017, 0.0
  %v1021 = vmax.f32 %v944, %v1020
  %s1022 = scalar_lea.vmem %s0, 104
  %v1023 = vld [vmem:[%s1022] sm:$0xff]
  %v1025 = vsel %vm23, %v1023, 0
  %1027 = vmatprep.subr.mxu0 0.0
  %1028 = vmatpush1.msra.mxu0 0.0
  %1029 = vmatprep.subr.mxu0 0.0
  %1030 = vmatpush1.msra.mxu0 0.0
  %1031 = vmatprep.subr.mxu0 0.0
  %1032 = vmatpush1.msra.mxu0 0.0
  %1033 = vmatprep.subr.mxu0 0.0
  %1034 = vmatpush1.msra.mxu0 0.0
  %1035 = vmatprep.subr.mxu0 0.0
  %1036 = vmatpush1.msra.mxu0 0.0
  %1037 = vmatprep.subr.mxu0 0.0
  %1038 = vmatpush1.msra.mxu0 0.0
  %1039 = vmatprep.subr.mxu0 0.0
  %1040 = vmatpush1.msra.mxu0 0.0
  %1041 = vmatprep.subr.mxu0 0.0
  %1042 = vmatpush1.msra.mxu0 0.0
  %1043 = vmatprep.subr.mxu0 0.0
  %1044 = vmatpush1.msra.mxu0 0.0
  %1045 = vmatprep.subr.mxu0 0.0
  %1046 = vmatpush1.msra.mxu0 0.0
  %1047 = vmatprep.subr.mxu0 0.0
  %1048 = vmatpush1.msra.mxu0 0.0
  %1049 = vmatprep.subr.mxu0 0.0
  %1050 = vmatpush1.msra.mxu0 0.0
  %1051 = vmatprep.subr.mxu0 0.0
  %1052 = vmatpush1.msra.mxu0 0.0
  %1053 = vmatprep.subr.mxu0 0.0
  %1054 = vmatpush1.msra.mxu0 0.0
  %1055 = vmatprep.subr.mxu0 0.0
  %1056 = vmatpush1.msra.mxu0 0.0
  %1057 = vmatprep.subr.mxu0 0.0
  %1058 = vmatpush1.msra.mxu0 %v14
  %1059 = vmatprep.subr.mxu0 0.0
  %1060 = vmatpush2.msra.mxu0 0.0
  %1061 = vmatprep.subr.mxu0 0.0
  %1062 = vmatpush2.msra.mxu0 0.0
  %1063 = vmatprep.subr.mxu0 0.0
  %1064 = vmatpush2.msra.mxu0 0.0
  %1065 = vmatprep.subr.mxu0 0.0
  %1066 = vmatpush2.msra.mxu0 0.0
  %1067 = vmatprep.subr.mxu0 0.0
  %1068 = vmatpush2.msra.mxu0 0.0
  %1069 = vmatprep.subr.mxu0 0.0
  %1070 = vmatpush2.msra.mxu0 0.0
  %1071 = vmatprep.subr.mxu0 0.0
  %1072 = vmatpush2.msra.mxu0 0.0
  %1073 = vmatprep.subr.mxu0 0.0
  %1074 = vmatpush2.msra.mxu0 0.0
  %1075 = vmatprep.subr.mxu0 0.0
  %1076 = vmatpush2.msra.mxu0 0.0
  %1077 = vmatprep.subr.mxu0 0.0
  %1078 = vmatpush2.msra.mxu0 0.0
  %1079 = vmatprep.subr.mxu0 0.0
  %1080 = vmatpush2.msra.mxu0 0.0
  %1081 = vmatprep.subr.mxu0 0.0
  %1082 = vmatpush2.msra.mxu0 0.0
  %1083 = vmatprep.subr.mxu0 0.0
  %1084 = vmatpush2.msra.mxu0 0.0
  %1085 = vmatprep.subr.mxu0 0.0
  %1086 = vmatpush2.msra.mxu0 0.0
  %1087 = vmatprep.subr.mxu0 0.0
  %1088 = vmatpush2.msra.mxu0 0.0
  %1089 = vmatprep.subr.mxu0 0.0
  %1090 = vmatpush2.msra.mxu0 0.0
  %1091 = vmatprep.mubr.f32.mxu0 0.0
  %1092 = vmatmul.mubr.f32.gmra.mxu0 %v1025
  %v1093 = vpop.f32.mrf.mxu0
  %v1094 = vadd.f32 %v21, %v1093
  %v1095 = vpop.f32.mrf.mxu0
  %1096 = vdwg.mxu0
  %v1097 = vmax.f32 %v1094, 0.0
  %v1098 = vmax.f32 %v1021, %v1097
  %s1099 = scalar_lea.vmem %s0, 112
  %v1100 = vld [vmem:[%s1099] sm:$0xff]
  %v1102 = vsel %vm23, %v1100, 0
  %1104 = vmatprep.subr.mxu0 0.0
  %1105 = vmatpush1.msra.mxu0 0.0
  %1106 = vmatprep.subr.mxu0 0.0
  %1107 = vmatpush1.msra.mxu0 0.0
  %1108 = vmatprep.subr.mxu0 0.0
  %1109 = vmatpush1.msra.mxu0 0.0
  %1110 = vmatprep.subr.mxu0 0.0
  %1111 = vmatpush1.msra.mxu0 0.0
  %1112 = vmatprep.subr.mxu0 0.0
  %1113 = vmatpush1.msra.mxu0 0.0
  %1114 = vmatprep.subr.mxu0 0.0
  %1115 = vmatpush1.msra.mxu0 0.0
  %1116 = vmatprep.subr.mxu0 0.0
  %1117 = vmatpush1.msra.mxu0 0.0
  %1118 = vmatprep.subr.mxu0 0.0
  %1119 = vmatpush1.msra.mxu0 0.0
  %1120 = vmatprep.subr.mxu0 0.0
  %1121 = vmatpush1.msra.mxu0 0.0
  %1122 = vmatprep.subr.mxu0 0.0
  %1123 = vmatpush1.msra.mxu0 0.0
  %1124 = vmatprep.subr.mxu0 0.0
  %1125 = vmatpush1.msra.mxu0 0.0
  %1126 = vmatprep.subr.mxu0 0.0
  %1127 = vmatpush1.msra.mxu0 0.0
  %1128 = vmatprep.subr.mxu0 0.0
  %1129 = vmatpush1.msra.mxu0 0.0
  %1130 = vmatprep.subr.mxu0 0.0
  %1131 = vmatpush1.msra.mxu0 0.0
  %1132 = vmatprep.subr.mxu0 0.0
  %1133 = vmatpush1.msra.mxu0 0.0
  %1134 = vmatprep.subr.mxu0 0.0
  %1135 = vmatpush1.msra.mxu0 %v14
  %1136 = vmatprep.subr.mxu0 0.0
  %1137 = vmatpush2.msra.mxu0 0.0
  %1138 = vmatprep.subr.mxu0 0.0
  %1139 = vmatpush2.msra.mxu0 0.0
  %1140 = vmatprep.subr.mxu0 0.0
  %1141 = vmatpush2.msra.mxu0 0.0
  %1142 = vmatprep.subr.mxu0 0.0
  %1143 = vmatpush2.msra.mxu0 0.0
  %1144 = vmatprep.subr.mxu0 0.0
  %1145 = vmatpush2.msra.mxu0 0.0
  %1146 = vmatprep.subr.mxu0 0.0
  %1147 = vmatpush2.msra.mxu0 0.0
  %1148 = vmatprep.subr.mxu0 0.0
  %1149 = vmatpush2.msra.mxu0 0.0
  %1150 = vmatprep.subr.mxu0 0.0
  %1151 = vmatpush2.msra.mxu0 0.0
  %1152 = vmatprep.subr.mxu0 0.0
  %1153 = vmatpush2.msra.mxu0 0.0
  %1154 = vmatprep.subr.mxu0 0.0
  %1155 = vmatpush2.msra.mxu0 0.0
  %1156 = vmatprep.subr.mxu0 0.0
  %1157 = vmatpush2.msra.mxu0 0.0
  %1158 = vmatprep.subr.mxu0 0.0
  %1159 = vmatpush2.msra.mxu0 0.0
  %1160 = vmatprep.subr.mxu0 0.0
  %1161 = vmatpush2.msra.mxu0 0.0
  %1162 = vmatprep.subr.mxu0 0.0
  %1163 = vmatpush2.msra.mxu0 0.0
  %1164 = vmatprep.subr.mxu0 0.0
  %1165 = vmatpush2.msra.mxu0 0.0
  %1166 = vmatprep.subr.mxu0 0.0
  %1167 = vmatpush2.msra.mxu0 0.0
  %1168 = vmatprep.mubr.f32.mxu0 0.0
  %1169 = vmatmul.mubr.f32.gmra.mxu0 %v1102
  %v1170 = vpop.f32.mrf.mxu0
  %v1171 = vadd.f32 %v21, %v1170
  %v1172 = vpop.f32.mrf.mxu0
  %1173 = vdwg.mxu0
  %v1174 = vmax.f32 %v1171, 0.0
  %v1175 = vmax.f32 %v1098, %v1174
  %s1176 = scalar_lea.vmem %s0, 120
  %v1177 = vld [vmem:[%s1176] sm:$0xff]
  %v1179 = vsel %vm23, %v1177, 0
  %1181 = vmatprep.subr.mxu0 0.0
  %1182 = vmatpush1.msra.mxu0 0.0
  %1183 = vmatprep.subr.mxu0 0.0
  %1184 = vmatpush1.msra.mxu0 0.0
  %1185 = vmatprep.subr.mxu0 0.0
  %1186 = vmatpush1.msra.mxu0 0.0
  %1187 = vmatprep.subr.mxu0 0.0
  %1188 = vmatpush1.msra.mxu0 0.0
  %1189 = vmatprep.subr.mxu0 0.0
  %1190 = vmatpush1.msra.mxu0 0.0
  %1191 = vmatprep.subr.mxu0 0.0
  %1192 = vmatpush1.msra.mxu0 0.0
  %1193 = vmatprep.subr.mxu0 0.0
  %1194 = vmatpush1.msra.mxu0 0.0
  %1195 = vmatprep.subr.mxu0 0.0
  %1196 = vmatpush1.msra.mxu0 0.0
  %1197 = vmatprep.subr.mxu0 0.0
  %1198 = vmatpush1.msra.mxu0 0.0
  %1199 = vmatprep.subr.mxu0 0.0
  %1200 = vmatpush1.msra.mxu0 0.0
  %1201 = vmatprep.subr.mxu0 0.0
  %1202 = vmatpush1.msra.mxu0 0.0
  %1203 = vmatprep.subr.mxu0 0.0
  %1204 = vmatpush1.msra.mxu0 0.0
  %1205 = vmatprep.subr.mxu0 0.0
  %1206 = vmatpush1.msra.mxu0 0.0
  %1207 = vmatprep.subr.mxu0 0.0
  %1208 = vmatpush1.msra.mxu0 0.0
  %1209 = vmatprep.subr.mxu0 0.0
  %1210 = vmatpush1.msra.mxu0 0.0
  %1211 = vmatprep.subr.mxu0 0.0
  %1212 = vmatpush1.msra.mxu0 %v14
  %1213 = vmatprep.subr.mxu0 0.0
  %1214 = vmatpush2.msra.mxu0 0.0
  %1215 = vmatprep.subr.mxu0 0.0
  %1216 = vmatpush2.msra.mxu0 0.0
  %1217 = vmatprep.subr.mxu0 0.0
  %1218 = vmatpush2.msra.mxu0 0.0
  %1219 = vmatprep.subr.mxu0 0.0
  %1220 = vmatpush2.msra.mxu0 0.0
  %1221 = vmatprep.subr.mxu0 0.0
  %1222 = vmatpush2.msra.mxu0 0.0
  %1223 = vmatprep.subr.mxu0 0.0
  %1224 = vmatpush2.msra.mxu0 0.0
  %1225 = vmatprep.subr.mxu0 0.0
  %1226 = vmatpush2.msra.mxu0 0.0
  %1227 = vmatprep.subr.mxu0 0.0
  %1228 = vmatpush2.msra.mxu0 0.0
  %1229 = vmatprep.subr.mxu0 0.0
  %1230 = vmatpush2.msra.mxu0 0.0
  %1231 = vmatprep.subr.mxu0 0.0
  %1232 = vmatpush2.msra.mxu0 0.0
  %1233 = vmatprep.subr.mxu0 0.0
  %1234 = vmatpush2.msra.mxu0 0.0
  %1235 = vmatprep.subr.mxu0 0.0
  %1236 = vmatpush2.msra.mxu0 0.0
  %1237 = vmatprep.subr.mxu0 0.0
  %1238 = vmatpush2.msra.mxu0 0.0
  %1239 = vmatprep.subr.mxu0 0.0
  %1240 = vmatpush2.msra.mxu0 0.0
  %1241 = vmatprep.subr.mxu0 0.0
  %1242 = vmatpush2.msra.mxu0 0.0
  %1243 = vmatprep.subr.mxu0 0.0
  %1244 = vmatpush2.msra.mxu0 0.0
  %1245 = vmatprep.mubr.f32.mxu0 0.0
  %1246 = vmatmul.mubr.f32.gmra.mxu0 %v1179
  %v1247 = vpop.f32.mrf.mxu0
  %v1248 = vadd.f32 %v21, %v1247
  %v1249 = vpop.f32.mrf.mxu0
  %1250 = vdwg.mxu0
  %v1251 = vmax.f32 %v1248, 0.0
  %v1252 = vmax.f32 %v1175, %v1251
  %vm1253 = vcmask 261120
  %1254 = vst.msk [vmem:[%s3] sm:$0xff] %vm1253, %v1252
  // Predicated region
  $region14: #{transition_down1.3} parent=0 // pred_check
    _
  $region15: #{transition_down1.3} parent=0 // pred_check_branch
    %1256 = sbr.rel (0) target = $region17
  $region16: #{transition_down1.3} parent=0 // pred_region
    _
  $region17: #{transition_down1.3} parent=0 // pred_fallthru
    _
  // Predicated region
  $region18: #{transition_down1.3} parent=0 // pred_check
    _
  $region19: #{transition_down1.3} parent=0 // pred_check_branch
    %1258 = sbr.rel (0) target = $region21
  $region20: #{transition_down1.3} parent=0 // pred_region
    _
  $region21: #{transition_down1.3} parent=0 // pred_fallthru
    _

</llo_original>
